<compile_context>
chip_gen: v6e
topology: v6e:2x2x1
jax: 0.10.0
libtpu: 0.0.40
codegen_flags: <defaults>
</compile_context>

<pallas_src>
from functools import partial

import jax
import jax.numpy as jnp
import numpy as np
from jax.experimental import pallas as pl
from jax.experimental.pallas import tpu as pltpu


def _prune_kernel(pos_sm, feats_ref, coords_ref, zf_hbm, zc_hbm,
                  outf_hbm, outc_hbm, fscr, cscr, sems):
    """Compact kept rows of one input block and DMA them to the HBM output.

    pos_sm:    [n_pad+1] int32 SMEM (scalar prefetch) -- exclusive prefix sum
               of the keep mask; pos[r] = number of kept rows before row r.
    feats_ref: [block_n, C]  VMEM tile of the features.
    coords_ref:[block_n, D1] VMEM tile of the coordinates.
    zf/zc_hbm: pre-zeroed HBM buffers aliased to the outputs (unused here).
    outf/outc_hbm: full HBM output refs (memory_space=ANY).
    fscr/cscr: [block_n, .] VMEM compaction scratch.
    sems:      DMA semaphores (one per output tensor).
    """
    del zf_hbm, zc_hbm  # aliased to the outputs; only there for pre-zeroing.

    step = pl.program_id(0)
    blk = feats_ref.shape[0]
    n_groups = blk // 8

    base_row = step * blk
    out_base = pos_sm[base_row]                      # global dst of 1st kept row
    block_keep = pos_sm[base_row + blk] - out_base   # kept rows in this block

    # ---- compact kept rows of this block into the VMEM scratch --------------
    def group_body(g, carry):
        r0 = base_row + g * 8
        s0 = pl.multiple_of(g * 8, 8)
        d0 = pos_sm[r0]
        kept = pos_sm[r0 + 8] - d0
        l0 = d0 - out_base                           # local dst inside scratch

        @pl.when(kept == 8)                          # fully-kept group: dense copy
        def _dense():
            fscr[pl.ds(l0, 8), :] = feats_ref[pl.ds(s0, 8), :]
            cscr[pl.ds(l0, 8), :] = coords_ref[pl.ds(s0, 8), :]

        @pl.when(jnp.logical_and(kept > 0, kept < 8))  # mixed group: per-row copies
        def _mixed():
            for j in range(8):
                dj = pos_sm[r0 + j]
                kj = pos_sm[r0 + j + 1] - dj

                @pl.when(kj > 0)
                def _copy_row(dj=dj, j=j):
                    lj = dj - out_base
                    fscr[pl.ds(lj, 1), :] = feats_ref[pl.ds(s0 + j, 1), :]
                    cscr[pl.ds(lj, 1), :] = coords_ref[pl.ds(s0 + j, 1), :]

        # fully-dropped groups (kept == 0) are skipped entirely.
        return carry

    jax.lax.fori_loop(0, n_groups, group_body, 0, unroll=min(8, n_groups))

    # ---- DMA exactly block_keep compacted rows to HBM at row out_base -------
    # Dynamic-size copies are expressed as a binary decomposition of
    # block_keep into at most log2(block_n)+1 static-size chunks.
    sizes = [1 << k for k in reversed(range(blk.bit_length()))]

    def emit(start):
        done = 0
        for s in sizes:
            take = jnp.bitwise_and(block_keep, s)    # == s if this bit is set

            @pl.when(take > 0)
            def _(done=done, s=s):
                cpf = pltpu.make_async_copy(
                    fscr.at[pl.ds(done, s), :],
                    outf_hbm.at[pl.ds(out_base + done, s), :],
                    sems.at[0])
                cpc = pltpu.make_async_copy(
                    cscr.at[pl.ds(done, s), :],
                    outc_hbm.at[pl.ds(out_base + done, s), :],
                    sems.at[1])
                if start:
                    cpf.start()
                    cpc.start()
                else:
                    cpf.wait()
                    cpc.wait()

            done = done + take

    emit(True)    # start all chunk DMAs for this block
    emit(False)   # wait before the scratch is reused by the next grid step


@partial(jax.jit, static_argnames=("block_n",))
def _minkowski_pruning_impl(feats, coords, mask, *, block_n):
    n, c = feats.shape
    d1 = coords.shape[1]
    coords = coords.astype(jnp.int32)

    grid_n = pl.cdiv(n, block_n)
    n_pad = grid_n * block_n

    # Exclusive prefix sum of the keep mask: pos[r] = #kept rows before row r.
    keep = mask.astype(jnp.int32)
    csum = jnp.cumsum(keep, dtype=jnp.int32)
    count = csum[-1]
    pos = jnp.concatenate([jnp.zeros((1,), jnp.int32), csum])
    pos = jnp.pad(pos, (0, n_pad - n), mode="edge")          # [n_pad + 1]

    # Pre-zeroed output buffers; aliased to the kernel outputs so rows >= count
    # stay zero without an in-kernel memset.
    zf = jnp.zeros((n, c), feats.dtype)
    zc = jnp.zeros((n, d1), jnp.int32)

    out_f, out_c = pl.pallas_call(
        _prune_kernel,
        out_shape=(jax.ShapeDtypeStruct((n, c), feats.dtype),
                   jax.ShapeDtypeStruct((n, d1), jnp.int32)),
        grid_spec=pltpu.PrefetchScalarGridSpec(
            num_scalar_prefetch=1,
            grid=(grid_n,),
            in_specs=[
                pl.BlockSpec((block_n, c), lambda i, pos: (i, 0)),
                pl.BlockSpec((block_n, d1), lambda i, pos: (i, 0)),
                pl.BlockSpec(memory_space=pl.ANY),   # pre-zeroed feats output
                pl.BlockSpec(memory_space=pl.ANY),   # pre-zeroed coords output
            ],
            out_specs=(pl.BlockSpec(memory_space=pl.ANY),
                       pl.BlockSpec(memory_space=pl.ANY)),
            scratch_shapes=[
                pltpu.VMEM((block_n, c), feats.dtype),
                pltpu.VMEM((block_n, d1), jnp.int32),
                pltpu.SemaphoreType.DMA((2,)),
            ]),
        # Operand indices include the scalar-prefetch arg: (pos, feats, coords, zf, zc).
        input_output_aliases={3: 0, 4: 1},
        compiler_params=pltpu.CompilerParams(
            # Disjoint per-block output ranges -> safe to shard row blocks
            # across both TensorCores on v7x (no-op on v5e/v6e).
            dimension_semantics=("parallel",)),
        cost_estimate=pl.CostEstimate(
            flops=0, transcendentals=0,
            bytes_accessed=2 * n * (c + d1) * 4 + (n_pad + 1) * 4),
    )(pos, feats, coords, zf, zc)

    return out_f, out_c, count


def minkowski_pruning(feats, coords, mask, *, block_n=None):
    """JAX equivalent of MinkowskiPruning()(SparseTensor(feats, coords), mask).

    Returns (out_feats [N, C], out_coords [N, D+1], count): the first `count`
    rows are the kept features/coordinates in input order (bit-exact copies),
    the remaining rows are zero padding.
    """
    n, c = feats.shape
    assert coords.shape[0] == n
    assert mask.shape == (n,)
    assert feats.dtype == jnp.float32, "only float32 features supported"
    # TODO(synk): bf16/fp16 features would need block_n rounded to the packed
    # sublane multiple; float32-only here, matching the previous version.

    if block_n is None:
        block_n = min(1024, n)
    block_n = max(8, ((block_n + 7) // 8) * 8)

    out_f, out_c, count = _minkowski_pruning_impl(
        feats, coords, mask, block_n=block_n)
    if out_c.dtype != coords.dtype:
        out_c = out_c.astype(coords.dtype)
    return out_f, out_c, count


if __name__ == "__main__":
    key = jax.random.PRNGKey(0)
    k1, k2, k3 = jax.random.split(key, 3)

    N, C, D = 32, 8, 3                       # N sparse points, C channels, D spatial dims
    feats = jax.random.normal(k1, (N, C), dtype=jnp.float32)
    coords = jax.random.randint(k2, (N, D + 1), 0, 16, dtype=jnp.int32)
    mask = jax.random.uniform(k3, (N,)) < 0.5
    mask = mask.at[0:8].set(True)            # fully-kept group  -> dense fast path
    mask = mask.at[16:24].set(False)         # fully-dropped group -> skip path

    # block_n=16 -> a 2-step grid: exercises cross-block offsets, the dense /
    # skip / mixed group paths and multi-chunk output DMAs.
    out_feats, out_coords, count = minkowski_pruning(feats, coords, mask, block_n=16)
    jax.block_until_ready((out_feats, out_coords, count))

    # Reference check against plain boolean-mask row selection (bit-exact).
    m_np = np.asarray(mask)
    M = int(m_np.sum())
    assert int(count) == M, (int(count), M)
    np.testing.assert_array_equal(np.asarray(out_feats)[:M],
                                  np.asarray(feats)[m_np])
    np.testing.assert_array_equal(np.asarray(out_coords)[:M],
                                  np.asarray(coords)[m_np])
    assert np.all(np.asarray(out_feats)[M:] == 0.0)
    assert np.all(np.asarray(out_coords)[M:] == 0)

    print("KERNEL_OK")
</pallas_src>

<mosaic_0001>
module attributes {stable_mosaic.version = 11 : i64} {
  func.func @_prune_kernel(%arg0: i32, %arg1: memref<33xi32, #tpu.memory_space<smem>>, %arg2: memref<16x8xf32, #tpu.memory_space<vmem>>, %arg3: memref<16x4xi32, #tpu.memory_space<vmem>>, %arg4: memref<32x8xf32, #tpu.memory_space<any>>, %arg5: memref<32x4xi32, #tpu.memory_space<any>>, %arg6: memref<32x8xf32, #tpu.memory_space<any>>, %arg7: memref<32x4xi32, #tpu.memory_space<any>>, %arg8: memref<16x8xf32, #tpu.memory_space<vmem>>, %arg9: memref<16x4xi32, #tpu.memory_space<vmem>>, %arg10: memref<2x!tpu.dma_semaphore, #tpu.memory_space<semaphore_mem>>) attributes {dimension_semantics = [#tpu.dimension_semantics<parallel>], iteration_bounds = array<i64: 2>, scalar_prefetch = 1 : i64, scratch_operands = 3 : i64, tpu.core_type = #tpu.core_type<tc>, window_params = [{transform_indices = @transform_0, window_bounds = array<i64: 16, 8>}, {transform_indices = @transform_1, window_bounds = array<i64: 16, 4>}, {}, {}, {}, {}]} {
    %c16_i32 = arith.constant 16 : i32
    %0 = arith.muli %arg0, %c16_i32 : i32
    %1 = arith.index_cast %0 : i32 to index
    %2 = memref.load %arg1[%1] : memref<33xi32, #tpu.memory_space<smem>>
    %c16_i32_0 = arith.constant 16 : i32
    %3 = arith.addi %0, %c16_i32_0 : i32
    %4 = arith.index_cast %3 : i32 to index
    %5 = memref.load %arg1[%4] : memref<33xi32, #tpu.memory_space<smem>>
    %6 = arith.subi %5, %2 : i32
    %c0_i32 = arith.constant 0 : i32
    %c8_i32 = arith.constant 8 : i32
    %7 = arith.muli %c0_i32, %c8_i32 : i32
    %8 = arith.addi %0, %7 : i32
    %c8_i32_1 = arith.constant 8 : i32
    %9 = arith.muli %c0_i32, %c8_i32_1 : i32
    %10 = tpu.assume_multiple %9, 8 : i32
    %11 = arith.index_cast %8 : i32 to index
    %12 = memref.load %arg1[%11] : memref<33xi32, #tpu.memory_space<smem>>
    %c8_i32_2 = arith.constant 8 : i32
    %13 = arith.addi %8, %c8_i32_2 : i32
    %14 = arith.index_cast %13 : i32 to index
    %15 = memref.load %arg1[%14] : memref<33xi32, #tpu.memory_space<smem>>
    %16 = arith.subi %15, %12 : i32
    %17 = arith.subi %12, %2 : i32
    %c8_i32_3 = arith.constant 8 : i32
    %18 = arith.cmpi eq, %16, %c8_i32_3 : i32
    %19 = arith.extui %18 : i1 to i32
    %c0_i32_4 = arith.constant 0 : i32
    %20 = arith.cmpi ne, %19, %c0_i32_4 : i32
    scf.if %20 {
      %93 = arith.index_cast %10 : i32 to index
      %c0 = arith.constant 0 : index
      %94 = vector.load %arg2[%93, %c0] : memref<16x8xf32, #tpu.memory_space<vmem>>, vector<8x8xf32>
      %95 = arith.index_cast %17 : i32 to index
      %c0_47 = arith.constant 0 : index
      %96 = vector.load %arg8[%95, %c0_47] : memref<16x8xf32, #tpu.memory_space<vmem>>, vector<8x8xf32>
      tpu.vector_store %arg8[%95, %c0_47], %94 {strides = array<i32>} : memref<16x8xf32, #tpu.memory_space<vmem>>, vector<8x8xf32>,
      %97 = arith.index_cast %10 : i32 to index
      %c0_48 = arith.constant 0 : index
      %98 = vector.load %arg3[%97, %c0_48] : memref<16x4xi32, #tpu.memory_space<vmem>>, vector<8x4xi32>
      %99 = arith.index_cast %17 : i32 to index
      %c0_49 = arith.constant 0 : index
      %100 = vector.load %arg9[%99, %c0_49] : memref<16x4xi32, #tpu.memory_space<vmem>>, vector<8x4xi32>
      tpu.vector_store %arg9[%99, %c0_49], %98 {strides = array<i32>} : memref<16x4xi32, #tpu.memory_space<vmem>>, vector<8x4xi32>,
    } else {
    }
    %c0_i32_5 = arith.constant 0 : i32
    %21 = arith.cmpi sgt, %16, %c0_i32_5 : i32
    %c8_i32_6 = arith.constant 8 : i32
    %22 = arith.cmpi slt, %16, %c8_i32_6 : i32
    %23 = arith.andi %21, %22 : i1
    %24 = arith.extui %23 : i1 to i32
    %c0_i32_7 = arith.constant 0 : i32
    %25 = arith.cmpi ne, %24, %c0_i32_7 : i32
    scf.if %25 {
      %c0_i32_47 = arith.constant 0 : i32
      %93 = arith.addi %8, %c0_i32_47 : i32
      %94 = arith.index_cast %93 : i32 to index
      %95 = memref.load %arg1[%94] : memref<33xi32, #tpu.memory_space<smem>>
      %c0_i32_48 = arith.constant 0 : i32
      %96 = arith.addi %8, %c0_i32_48 : i32
      %c1_i32_49 = arith.constant 1 : i32
      %97 = arith.addi %96, %c1_i32_49 : i32
      %98 = arith.index_cast %97 : i32 to index
      %99 = memref.load %arg1[%98] : memref<33xi32, #tpu.memory_space<smem>>
      %100 = arith.subi %99, %95 : i32
      %c0_i32_50 = arith.constant 0 : i32
      %101 = arith.cmpi sgt, %100, %c0_i32_50 : i32
      %102 = arith.extui %101 : i1 to i32
      %c0_i32_51 = arith.constant 0 : i32
      %103 = arith.cmpi ne, %102, %c0_i32_51 : i32
      scf.if %103 {
        %181 = arith.subi %95, %2 : i32
        %c0_i32_83 = arith.constant 0 : i32
        %182 = arith.addi %10, %c0_i32_83 : i32
        %183 = arith.index_cast %182 : i32 to index
        %c0 = arith.constant 0 : index
        %184 = vector.load %arg2[%183, %c0] : memref<16x8xf32, #tpu.memory_space<vmem>>, vector<1x8xf32>
        %185 = arith.index_cast %181 : i32 to index
        %c0_84 = arith.constant 0 : index
        %186 = vector.load %arg8[%185, %c0_84] : memref<16x8xf32, #tpu.memory_space<vmem>>, vector<1x8xf32>
        tpu.vector_store %arg8[%185, %c0_84], %184 {strides = array<i32>} : memref<16x8xf32, #tpu.memory_space<vmem>>, vector<1x8xf32>,
        %c0_i32_85 = arith.constant 0 : i32
        %187 = arith.addi %10, %c0_i32_85 : i32
        %188 = arith.index_cast %187 : i32 to index
        %c0_86 = arith.constant 0 : index
        %189 = vector.load %arg3[%188, %c0_86] : memref<16x4xi32, #tpu.memory_space<vmem>>, vector<1x4xi32>
        %190 = arith.index_cast %181 : i32 to index
        %c0_87 = arith.constant 0 : index
        %191 = vector.load %arg9[%190, %c0_87] : memref<16x4xi32, #tpu.memory_space<vmem>>, vector<1x4xi32>
        tpu.vector_store %arg9[%190, %c0_87], %189 {strides = array<i32>} : memref<16x4xi32, #tpu.memory_space<vmem>>, vector<1x4xi32>,
      } else {
      }
      %c1_i32_52 = arith.constant 1 : i32
      %104 = arith.addi %8, %c1_i32_52 : i32
      %105 = arith.index_cast %104 : i32 to index
      %106 = memref.load %arg1[%105] : memref<33xi32, #tpu.memory_space<smem>>
      %c1_i32_53 = arith.constant 1 : i32
      %107 = arith.addi %8, %c1_i32_53 : i32
      %c1_i32_54 = arith.constant 1 : i32
      %108 = arith.addi %107, %c1_i32_54 : i32
      %109 = arith.index_cast %108 : i32 to index
      %110 = memref.load %arg1[%109] : memref<33xi32, #tpu.memory_space<smem>>
      %111 = arith.subi %110, %106 : i32
      %c0_i32_55 = arith.constant 0 : i32
      %112 = arith.cmpi sgt, %111, %c0_i32_55 : i32
      %113 = arith.extui %112 : i1 to i32
      %c0_i32_56 = arith.constant 0 : i32
      %114 = arith.cmpi ne, %113, %c0_i32_56 : i32
      scf.if %114 {
        %181 = arith.subi %106, %2 : i32
        %c1_i32_83 = arith.constant 1 : i32
        %182 = arith.addi %10, %c1_i32_83 : i32
        %183 = arith.index_cast %182 : i32 to index
        %c0 = arith.constant 0 : index
        %184 = vector.load %arg2[%183, %c0] : memref<16x8xf32, #tpu.memory_space<vmem>>, vector<1x8xf32>
        %185 = arith.index_cast %181 : i32 to index
        %c0_84 = arith.constant 0 : index
        %186 = vector.load %arg8[%185, %c0_84] : memref<16x8xf32, #tpu.memory_space<vmem>>, vector<1x8xf32>
        tpu.vector_store %arg8[%185, %c0_84], %184 {strides = array<i32>} : memref<16x8xf32, #tpu.memory_space<vmem>>, vector<1x8xf32>,
        %c1_i32_85 = arith.constant 1 : i32
        %187 = arith.addi %10, %c1_i32_85 : i32
        %188 = arith.index_cast %187 : i32 to index
        %c0_86 = arith.constant 0 : index
        %189 = vector.load %arg3[%188, %c0_86] : memref<16x4xi32, #tpu.memory_space<vmem>>, vector<1x4xi32>
        %190 = arith.index_cast %181 : i32 to index
        %c0_87 = arith.constant 0 : index
        %191 = vector.load %arg9[%190, %c0_87] : memref<16x4xi32, #tpu.memory_space<vmem>>, vector<1x4xi32>
        tpu.vector_store %arg9[%190, %c0_87], %189 {strides = array<i32>} : memref<16x4xi32, #tpu.memory_space<vmem>>, vector<1x4xi32>,
      } else {
      }
      %c2_i32_57 = arith.constant 2 : i32
      %115 = arith.addi %8, %c2_i32_57 : i32
      %116 = arith.index_cast %115 : i32 to index
      %117 = memref.load %arg1[%116] : memref<33xi32, #tpu.memory_space<smem>>
      %c2_i32_58 = arith.constant 2 : i32
      %118 = arith.addi %8, %c2_i32_58 : i32
      %c1_i32_59 = arith.constant 1 : i32
      %119 = arith.addi %118, %c1_i32_59 : i32
      %120 = arith.index_cast %119 : i32 to index
      %121 = memref.load %arg1[%120] : memref<33xi32, #tpu.memory_space<smem>>
      %122 = arith.subi %121, %117 : i32
      %c0_i32_60 = arith.constant 0 : i32
      %123 = arith.cmpi sgt, %122, %c0_i32_60 : i32
      %124 = arith.extui %123 : i1 to i32
      %c0_i32_61 = arith.constant 0 : i32
      %125 = arith.cmpi ne, %124, %c0_i32_61 : i32
      scf.if %125 {
        %181 = arith.subi %117, %2 : i32
        %c2_i32_83 = arith.constant 2 : i32
        %182 = arith.addi %10, %c2_i32_83 : i32
        %183 = arith.index_cast %182 : i32 to index
        %c0 = arith.constant 0 : index
        %184 = vector.load %arg2[%183, %c0] : memref<16x8xf32, #tpu.memory_space<vmem>>, vector<1x8xf32>
        %185 = arith.index_cast %181 : i32 to index
        %c0_84 = arith.constant 0 : index
        %186 = vector.load %arg8[%185, %c0_84] : memref<16x8xf32, #tpu.memory_space<vmem>>, vector<1x8xf32>
        tpu.vector_store %arg8[%185, %c0_84], %184 {strides = array<i32>} : memref<16x8xf32, #tpu.memory_space<vmem>>, vector<1x8xf32>,
        %c2_i32_85 = arith.constant 2 : i32
        %187 = arith.addi %10, %c2_i32_85 : i32
        %188 = arith.index_cast %187 : i32 to index
        %c0_86 = arith.constant 0 : index
        %189 = vector.load %arg3[%188, %c0_86] : memref<16x4xi32, #tpu.memory_space<vmem>>, vector<1x4xi32>
        %190 = arith.index_cast %181 : i32 to index
        %c0_87 = arith.constant 0 : index
        %191 = vector.load %arg9[%190, %c0_87] : memref<16x4xi32, #tpu.memory_space<vmem>>, vector<1x4xi32>
        tpu.vector_store %arg9[%190, %c0_87], %189 {strides = array<i32>} : memref<16x4xi32, #tpu.memory_space<vmem>>, vector<1x4xi32>,
      } else {
      }
      %c3_i32 = arith.constant 3 : i32
      %126 = arith.addi %8, %c3_i32 : i32
      %127 = arith.index_cast %126 : i32 to index
      %128 = memref.load %arg1[%127] : memref<33xi32, #tpu.memory_space<smem>>
      %c3_i32_62 = arith.constant 3 : i32
      %129 = arith.addi %8, %c3_i32_62 : i32
      %c1_i32_63 = arith.constant 1 : i32
      %130 = arith.addi %129, %c1_i32_63 : i32
      %131 = arith.index_cast %130 : i32 to index
      %132 = memref.load %arg1[%131] : memref<33xi32, #tpu.memory_space<smem>>
      %133 = arith.subi %132, %128 : i32
      %c0_i32_64 = arith.constant 0 : i32
      %134 = arith.cmpi sgt, %133, %c0_i32_64 : i32
      %135 = arith.extui %134 : i1 to i32
      %c0_i32_65 = arith.constant 0 : i32
      %136 = arith.cmpi ne, %135, %c0_i32_65 : i32
      scf.if %136 {
        %181 = arith.subi %128, %2 : i32
        %c3_i32_83 = arith.constant 3 : i32
        %182 = arith.addi %10, %c3_i32_83 : i32
        %183 = arith.index_cast %182 : i32 to index
        %c0 = arith.constant 0 : index
        %184 = vector.load %arg2[%183, %c0] : memref<16x8xf32, #tpu.memory_space<vmem>>, vector<1x8xf32>
        %185 = arith.index_cast %181 : i32 to index
        %c0_84 = arith.constant 0 : index
        %186 = vector.load %arg8[%185, %c0_84] : memref<16x8xf32, #tpu.memory_space<vmem>>, vector<1x8xf32>
        tpu.vector_store %arg8[%185, %c0_84], %184 {strides = array<i32>} : memref<16x8xf32, #tpu.memory_space<vmem>>, vector<1x8xf32>,
        %c3_i32_85 = arith.constant 3 : i32
        %187 = arith.addi %10, %c3_i32_85 : i32
        %188 = arith.index_cast %187 : i32 to index
        %c0_86 = arith.constant 0 : index
        %189 = vector.load %arg3[%188, %c0_86] : memref<16x4xi32, #tpu.memory_space<vmem>>, vector<1x4xi32>
        %190 = arith.index_cast %181 : i32 to index
        %c0_87 = arith.constant 0 : index
        %191 = vector.load %arg9[%190, %c0_87] : memref<16x4xi32, #tpu.memory_space<vmem>>, vector<1x4xi32>
        tpu.vector_store %arg9[%190, %c0_87], %189 {strides = array<i32>} : memref<16x4xi32, #tpu.memory_space<vmem>>, vector<1x4xi32>,
      } else {
      }
      %c4_i32_66 = arith.constant 4 : i32
      %137 = arith.addi %8, %c4_i32_66 : i32
      %138 = arith.index_cast %137 : i32 to index
      %139 = memref.load %arg1[%138] : memref<33xi32, #tpu.memory_space<smem>>
      %c4_i32_67 = arith.constant 4 : i32
      %140 = arith.addi %8, %c4_i32_67 : i32
      %c1_i32_68 = arith.constant 1 : i32
      %141 = arith.addi %140, %c1_i32_68 : i32
      %142 = arith.index_cast %141 : i32 to index
      %143 = memref.load %arg1[%142] : memref<33xi32, #tpu.memory_space<smem>>
      %144 = arith.subi %143, %139 : i32
      %c0_i32_69 = arith.constant 0 : i32
      %145 = arith.cmpi sgt, %144, %c0_i32_69 : i32
      %146 = arith.extui %145 : i1 to i32
      %c0_i32_70 = arith.constant 0 : i32
      %147 = arith.cmpi ne, %146, %c0_i32_70 : i32
      scf.if %147 {
        %181 = arith.subi %139, %2 : i32
        %c4_i32_83 = arith.constant 4 : i32
        %182 = arith.addi %10, %c4_i32_83 : i32
        %183 = arith.index_cast %182 : i32 to index
        %c0 = arith.constant 0 : index
        %184 = vector.load %arg2[%183, %c0] : memref<16x8xf32, #tpu.memory_space<vmem>>, vector<1x8xf32>
        %185 = arith.index_cast %181 : i32 to index
        %c0_84 = arith.constant 0 : index
        %186 = vector.load %arg8[%185, %c0_84] : memref<16x8xf32, #tpu.memory_space<vmem>>, vector<1x8xf32>
        tpu.vector_store %arg8[%185, %c0_84], %184 {strides = array<i32>} : memref<16x8xf32, #tpu.memory_space<vmem>>, vector<1x8xf32>,
        %c4_i32_85 = arith.constant 4 : i32
        %187 = arith.addi %10, %c4_i32_85 : i32
        %188 = arith.index_cast %187 : i32 to index
        %c0_86 = arith.constant 0 : index
        %189 = vector.load %arg3[%188, %c0_86] : memref<16x4xi32, #tpu.memory_space<vmem>>, vector<1x4xi32>
        %190 = arith.index_cast %181 : i32 to index
        %c0_87 = arith.constant 0 : index
        %191 = vector.load %arg9[%190, %c0_87] : memref<16x4xi32, #tpu.memory_space<vmem>>, vector<1x4xi32>
        tpu.vector_store %arg9[%190, %c0_87], %189 {strides = array<i32>} : memref<16x4xi32, #tpu.memory_space<vmem>>, vector<1x4xi32>,
      } else {
      }
      %c5_i32 = arith.constant 5 : i32
      %148 = arith.addi %8, %c5_i32 : i32
      %149 = arith.index_cast %148 : i32 to index
      %150 = memref.load %arg1[%149] : memref<33xi32, #tpu.memory_space<smem>>
      %c5_i32_71 = arith.constant 5 : i32
      %151 = arith.addi %8, %c5_i32_71 : i32
      %c1_i32_72 = arith.constant 1 : i32
      %152 = arith.addi %151, %c1_i32_72 : i32
      %153 = arith.index_cast %152 : i32 to index
      %154 = memref.load %arg1[%153] : memref<33xi32, #tpu.memory_space<smem>>
      %155 = arith.subi %154, %150 : i32
      %c0_i32_73 = arith.constant 0 : i32
      %156 = arith.cmpi sgt, %155, %c0_i32_73 : i32
      %157 = arith.extui %156 : i1 to i32
      %c0_i32_74 = arith.constant 0 : i32
      %158 = arith.cmpi ne, %157, %c0_i32_74 : i32
      scf.if %158 {
        %181 = arith.subi %150, %2 : i32
        %c5_i32_83 = arith.constant 5 : i32
        %182 = arith.addi %10, %c5_i32_83 : i32
        %183 = arith.index_cast %182 : i32 to index
        %c0 = arith.constant 0 : index
        %184 = vector.load %arg2[%183, %c0] : memref<16x8xf32, #tpu.memory_space<vmem>>, vector<1x8xf32>
        %185 = arith.index_cast %181 : i32 to index
        %c0_84 = arith.constant 0 : index
        %186 = vector.load %arg8[%185, %c0_84] : memref<16x8xf32, #tpu.memory_space<vmem>>, vector<1x8xf32>
        tpu.vector_store %arg8[%185, %c0_84], %184 {strides = array<i32>} : memref<16x8xf32, #tpu.memory_space<vmem>>, vector<1x8xf32>,
        %c5_i32_85 = arith.constant 5 : i32
        %187 = arith.addi %10, %c5_i32_85 : i32
        %188 = arith.index_cast %187 : i32 to index
        %c0_86 = arith.constant 0 : index
        %189 = vector.load %arg3[%188, %c0_86] : memref<16x4xi32, #tpu.memory_space<vmem>>, vector<1x4xi32>
        %190 = arith.index_cast %181 : i32 to index
        %c0_87 = arith.constant 0 : index
        %191 = vector.load %arg9[%190, %c0_87] : memref<16x4xi32, #tpu.memory_space<vmem>>, vector<1x4xi32>
        tpu.vector_store %arg9[%190, %c0_87], %189 {strides = array<i32>} : memref<16x4xi32, #tpu.memory_space<vmem>>, vector<1x4xi32>,
      } else {
      }
      %c6_i32 = arith.constant 6 : i32
      %159 = arith.addi %8, %c6_i32 : i32
      %160 = arith.index_cast %159 : i32 to index
      %161 = memref.load %arg1[%160] : memref<33xi32, #tpu.memory_space<smem>>
      %c6_i32_75 = arith.constant 6 : i32
      %162 = arith.addi %8, %c6_i32_75 : i32
      %c1_i32_76 = arith.constant 1 : i32
      %163 = arith.addi %162, %c1_i32_76 : i32
      %164 = arith.index_cast %163 : i32 to index
      %165 = memref.load %arg1[%164] : memref<33xi32, #tpu.memory_space<smem>>
      %166 = arith.subi %165, %161 : i32
      %c0_i32_77 = arith.constant 0 : i32
      %167 = arith.cmpi sgt, %166, %c0_i32_77 : i32
      %168 = arith.extui %167 : i1 to i32
      %c0_i32_78 = arith.constant 0 : i32
      %169 = arith.cmpi ne, %168, %c0_i32_78 : i32
      scf.if %169 {
        %181 = arith.subi %161, %2 : i32
        %c6_i32_83 = arith.constant 6 : i32
        %182 = arith.addi %10, %c6_i32_83 : i32
        %183 = arith.index_cast %182 : i32 to index
        %c0 = arith.constant 0 : index
        %184 = vector.load %arg2[%183, %c0] : memref<16x8xf32, #tpu.memory_space<vmem>>, vector<1x8xf32>
        %185 = arith.index_cast %181 : i32 to index
        %c0_84 = arith.constant 0 : index
        %186 = vector.load %arg8[%185, %c0_84] : memref<16x8xf32, #tpu.memory_space<vmem>>, vector<1x8xf32>
        tpu.vector_store %arg8[%185, %c0_84], %184 {strides = array<i32>} : memref<16x8xf32, #tpu.memory_space<vmem>>, vector<1x8xf32>,
        %c6_i32_85 = arith.constant 6 : i32
        %187 = arith.addi %10, %c6_i32_85 : i32
        %188 = arith.index_cast %187 : i32 to index
        %c0_86 = arith.constant 0 : index
        %189 = vector.load %arg3[%188, %c0_86] : memref<16x4xi32, #tpu.memory_space<vmem>>, vector<1x4xi32>
        %190 = arith.index_cast %181 : i32 to index
        %c0_87 = arith.constant 0 : index
        %191 = vector.load %arg9[%190, %c0_87] : memref<16x4xi32, #tpu.memory_space<vmem>>, vector<1x4xi32>
        tpu.vector_store %arg9[%190, %c0_87], %189 {strides = array<i32>} : memref<16x4xi32, #tpu.memory_space<vmem>>, vector<1x4xi32>,
      } else {
      }
      %c7_i32 = arith.constant 7 : i32
      %170 = arith.addi %8, %c7_i32 : i32
      %171 = arith.index_cast %170 : i32 to index
      %172 = memref.load %arg1[%171] : memref<33xi32, #tpu.memory_space<smem>>
      %c7_i32_79 = arith.constant 7 : i32
      %173 = arith.addi %8, %c7_i32_79 : i32
      %c1_i32_80 = arith.constant 1 : i32
      %174 = arith.addi %173, %c1_i32_80 : i32
      %175 = arith.index_cast %174 : i32 to index
      %176 = memref.load %arg1[%175] : memref<33xi32, #tpu.memory_space<smem>>
      %177 = arith.subi %176, %172 : i32
      %c0_i32_81 = arith.constant 0 : i32
      %178 = arith.cmpi sgt, %177, %c0_i32_81 : i32
      %179 = arith.extui %178 : i1 to i32
      %c0_i32_82 = arith.constant 0 : i32
      %180 = arith.cmpi ne, %179, %c0_i32_82 : i32
      scf.if %180 {
        %181 = arith.subi %172, %2 : i32
        %c7_i32_83 = arith.constant 7 : i32
        %182 = arith.addi %10, %c7_i32_83 : i32
        %183 = arith.index_cast %182 : i32 to index
        %c0 = arith.constant 0 : index
        %184 = vector.load %arg2[%183, %c0] : memref<16x8xf32, #tpu.memory_space<vmem>>, vector<1x8xf32>
        %185 = arith.index_cast %181 : i32 to index
        %c0_84 = arith.constant 0 : index
        %186 = vector.load %arg8[%185, %c0_84] : memref<16x8xf32, #tpu.memory_space<vmem>>, vector<1x8xf32>
        tpu.vector_store %arg8[%185, %c0_84], %184 {strides = array<i32>} : memref<16x8xf32, #tpu.memory_space<vmem>>, vector<1x8xf32>,
        %c7_i32_85 = arith.constant 7 : i32
        %187 = arith.addi %10, %c7_i32_85 : i32
        %188 = arith.index_cast %187 : i32 to index
        %c0_86 = arith.constant 0 : index
        %189 = vector.load %arg3[%188, %c0_86] : memref<16x4xi32, #tpu.memory_space<vmem>>, vector<1x4xi32>
        %190 = arith.index_cast %181 : i32 to index
        %c0_87 = arith.constant 0 : index
        %191 = vector.load %arg9[%190, %c0_87] : memref<16x4xi32, #tpu.memory_space<vmem>>, vector<1x4xi32>
        tpu.vector_store %arg9[%190, %c0_87], %189 {strides = array<i32>} : memref<16x4xi32, #tpu.memory_space<vmem>>, vector<1x4xi32>,
      } else {
      }
    } else {
    }
    %c1_i32 = arith.constant 1 : i32
    %c8_i32_8 = arith.constant 8 : i32
    %26 = arith.muli %c1_i32, %c8_i32_8 : i32
    %27 = arith.addi %0, %26 : i32
    %c8_i32_9 = arith.constant 8 : i32
    %28 = arith.muli %c1_i32, %c8_i32_9 : i32
    %29 = tpu.assume_multiple %28, 8 : i32
    %30 = arith.index_cast %27 : i32 to index
    %31 = memref.load %arg1[%30] : memref<33xi32, #tpu.memory_space<smem>>
    %c8_i32_10 = arith.constant 8 : i32
    %32 = arith.addi %27, %c8_i32_10 : i32
    %33 = arith.index_cast %32 : i32 to index
    %34 = memref.load %arg1[%33] : memref<33xi32, #tpu.memory_space<smem>>
    %35 = arith.subi %34, %31 : i32
    %36 = arith.subi %31, %2 : i32
    %c8_i32_11 = arith.constant 8 : i32
    %37 = arith.cmpi eq, %35, %c8_i32_11 : i32
    %38 = arith.extui %37 : i1 to i32
    %c0_i32_12 = arith.constant 0 : i32
    %39 = arith.cmpi ne, %38, %c0_i32_12 : i32
    scf.if %39 {
      %93 = arith.index_cast %29 : i32 to index
      %c0 = arith.constant 0 : index
      %94 = vector.load %arg2[%93, %c0] : memref<16x8xf32, #tpu.memory_space<vmem>>, vector<8x8xf32>
      %95 = arith.index_cast %36 : i32 to index
      %c0_47 = arith.constant 0 : index
      %96 = vector.load %arg8[%95, %c0_47] : memref<16x8xf32, #tpu.memory_space<vmem>>, vector<8x8xf32>
      tpu.vector_store %arg8[%95, %c0_47], %94 {strides = array<i32>} : memref<16x8xf32, #tpu.memory_space<vmem>>, vector<8x8xf32>,
      %97 = arith.index_cast %29 : i32 to index
      %c0_48 = arith.constant 0 : index
      %98 = vector.load %arg3[%97, %c0_48] : memref<16x4xi32, #tpu.memory_space<vmem>>, vector<8x4xi32>
      %99 = arith.index_cast %36 : i32 to index
      %c0_49 = arith.constant 0 : index
      %100 = vector.load %arg9[%99, %c0_49] : memref<16x4xi32, #tpu.memory_space<vmem>>, vector<8x4xi32>
      tpu.vector_store %arg9[%99, %c0_49], %98 {strides = array<i32>} : memref<16x4xi32, #tpu.memory_space<vmem>>, vector<8x4xi32>,
    } else {
    }
    %c0_i32_13 = arith.constant 0 : i32
    %40 = arith.cmpi sgt, %35, %c0_i32_13 : i32
    %c8_i32_14 = arith.constant 8 : i32
    %41 = arith.cmpi slt, %35, %c8_i32_14 : i32
    %42 = arith.andi %40, %41 : i1
    %43 = arith.extui %42 : i1 to i32
    %c0_i32_15 = arith.constant 0 : i32
    %44 = arith.cmpi ne, %43, %c0_i32_15 : i32
    scf.if %44 {
      %c0_i32_47 = arith.constant 0 : i32
      %93 = arith.addi %27, %c0_i32_47 : i32
      %94 = arith.index_cast %93 : i32 to index
      %95 = memref.load %arg1[%94] : memref<33xi32, #tpu.memory_space<smem>>
      %c0_i32_48 = arith.constant 0 : i32
      %96 = arith.addi %27, %c0_i32_48 : i32
      %c1_i32_49 = arith.constant 1 : i32
      %97 = arith.addi %96, %c1_i32_49 : i32
      %98 = arith.index_cast %97 : i32 to index
      %99 = memref.load %arg1[%98] : memref<33xi32, #tpu.memory_space<smem>>
      %100 = arith.subi %99, %95 : i32
      %c0_i32_50 = arith.constant 0 : i32
      %101 = arith.cmpi sgt, %100, %c0_i32_50 : i32
      %102 = arith.extui %101 : i1 to i32
      %c0_i32_51 = arith.constant 0 : i32
      %103 = arith.cmpi ne, %102, %c0_i32_51 : i32
      scf.if %103 {
        %181 = arith.subi %95, %2 : i32
        %c0_i32_83 = arith.constant 0 : i32
        %182 = arith.addi %29, %c0_i32_83 : i32
        %183 = arith.index_cast %182 : i32 to index
        %c0 = arith.constant 0 : index
        %184 = vector.load %arg2[%183, %c0] : memref<16x8xf32, #tpu.memory_space<vmem>>, vector<1x8xf32>
        %185 = arith.index_cast %181 : i32 to index
        %c0_84 = arith.constant 0 : index
        %186 = vector.load %arg8[%185, %c0_84] : memref<16x8xf32, #tpu.memory_space<vmem>>, vector<1x8xf32>
        tpu.vector_store %arg8[%185, %c0_84], %184 {strides = array<i32>} : memref<16x8xf32, #tpu.memory_space<vmem>>, vector<1x8xf32>,
        %c0_i32_85 = arith.constant 0 : i32
        %187 = arith.addi %29, %c0_i32_85 : i32
        %188 = arith.index_cast %187 : i32 to index
        %c0_86 = arith.constant 0 : index
        %189 = vector.load %arg3[%188, %c0_86] : memref<16x4xi32, #tpu.memory_space<vmem>>, vector<1x4xi32>
        %190 = arith.index_cast %181 : i32 to index
        %c0_87 = arith.constant 0 : index
        %191 = vector.load %arg9[%190, %c0_87] : memref<16x4xi32, #tpu.memory_space<vmem>>, vector<1x4xi32>
        tpu.vector_store %arg9[%190, %c0_87], %189 {strides = array<i32>} : memref<16x4xi32, #tpu.memory_space<vmem>>, vector<1x4xi32>,
      } else {
      }
      %c1_i32_52 = arith.constant 1 : i32
      %104 = arith.addi %27, %c1_i32_52 : i32
      %105 = arith.index_cast %104 : i32 to index
      %106 = memref.load %arg1[%105] : memref<33xi32, #tpu.memory_space<smem>>
      %c1_i32_53 = arith.constant 1 : i32
      %107 = arith.addi %27, %c1_i32_53 : i32
      %c1_i32_54 = arith.constant 1 : i32
      %108 = arith.addi %107, %c1_i32_54 : i32
      %109 = arith.index_cast %108 : i32 to index
      %110 = memref.load %arg1[%109] : memref<33xi32, #tpu.memory_space<smem>>
      %111 = arith.subi %110, %106 : i32
      %c0_i32_55 = arith.constant 0 : i32
      %112 = arith.cmpi sgt, %111, %c0_i32_55 : i32
      %113 = arith.extui %112 : i1 to i32
      %c0_i32_56 = arith.constant 0 : i32
      %114 = arith.cmpi ne, %113, %c0_i32_56 : i32
      scf.if %114 {
        %181 = arith.subi %106, %2 : i32
        %c1_i32_83 = arith.constant 1 : i32
        %182 = arith.addi %29, %c1_i32_83 : i32
        %183 = arith.index_cast %182 : i32 to index
        %c0 = arith.constant 0 : index
        %184 = vector.load %arg2[%183, %c0] : memref<16x8xf32, #tpu.memory_space<vmem>>, vector<1x8xf32>
        %185 = arith.index_cast %181 : i32 to index
        %c0_84 = arith.constant 0 : index
        %186 = vector.load %arg8[%185, %c0_84] : memref<16x8xf32, #tpu.memory_space<vmem>>, vector<1x8xf32>
        tpu.vector_store %arg8[%185, %c0_84], %184 {strides = array<i32>} : memref<16x8xf32, #tpu.memory_space<vmem>>, vector<1x8xf32>,
        %c1_i32_85 = arith.constant 1 : i32
        %187 = arith.addi %29, %c1_i32_85 : i32
        %188 = arith.index_cast %187 : i32 to index
        %c0_86 = arith.constant 0 : index
        %189 = vector.load %arg3[%188, %c0_86] : memref<16x4xi32, #tpu.memory_space<vmem>>, vector<1x4xi32>
        %190 = arith.index_cast %181 : i32 to index
        %c0_87 = arith.constant 0 : index
        %191 = vector.load %arg9[%190, %c0_87] : memref<16x4xi32, #tpu.memory_space<vmem>>, vector<1x4xi32>
        tpu.vector_store %arg9[%190, %c0_87], %189 {strides = array<i32>} : memref<16x4xi32, #tpu.memory_space<vmem>>, vector<1x4xi32>,
      } else {
      }
      %c2_i32_57 = arith.constant 2 : i32
      %115 = arith.addi %27, %c2_i32_57 : i32
      %116 = arith.index_cast %115 : i32 to index
      %117 = memref.load %arg1[%116] : memref<33xi32, #tpu.memory_space<smem>>
      %c2_i32_58 = arith.constant 2 : i32
      %118 = arith.addi %27, %c2_i32_58 : i32
      %c1_i32_59 = arith.constant 1 : i32
      %119 = arith.addi %118, %c1_i32_59 : i32
      %120 = arith.index_cast %119 : i32 to index
      %121 = memref.load %arg1[%120] : memref<33xi32, #tpu.memory_space<smem>>
      %122 = arith.subi %121, %117 : i32
      %c0_i32_60 = arith.constant 0 : i32
      %123 = arith.cmpi sgt, %122, %c0_i32_60 : i32
      %124 = arith.extui %123 : i1 to i32
      %c0_i32_61 = arith.constant 0 : i32
      %125 = arith.cmpi ne, %124, %c0_i32_61 : i32
      scf.if %125 {
        %181 = arith.subi %117, %2 : i32
        %c2_i32_83 = arith.constant 2 : i32
        %182 = arith.addi %29, %c2_i32_83 : i32
        %183 = arith.index_cast %182 : i32 to index
        %c0 = arith.constant 0 : index
        %184 = vector.load %arg2[%183, %c0] : memref<16x8xf32, #tpu.memory_space<vmem>>, vector<1x8xf32>
        %185 = arith.index_cast %181 : i32 to index
        %c0_84 = arith.constant 0 : index
        %186 = vector.load %arg8[%185, %c0_84] : memref<16x8xf32, #tpu.memory_space<vmem>>, vector<1x8xf32>
        tpu.vector_store %arg8[%185, %c0_84], %184 {strides = array<i32>} : memref<16x8xf32, #tpu.memory_space<vmem>>, vector<1x8xf32>,
        %c2_i32_85 = arith.constant 2 : i32
        %187 = arith.addi %29, %c2_i32_85 : i32
        %188 = arith.index_cast %187 : i32 to index
        %c0_86 = arith.constant 0 : index
        %189 = vector.load %arg3[%188, %c0_86] : memref<16x4xi32, #tpu.memory_space<vmem>>, vector<1x4xi32>
        %190 = arith.index_cast %181 : i32 to index
        %c0_87 = arith.constant 0 : index
        %191 = vector.load %arg9[%190, %c0_87] : memref<16x4xi32, #tpu.memory_space<vmem>>, vector<1x4xi32>
        tpu.vector_store %arg9[%190, %c0_87], %189 {strides = array<i32>} : memref<16x4xi32, #tpu.memory_space<vmem>>, vector<1x4xi32>,
      } else {
      }
      %c3_i32 = arith.constant 3 : i32
      %126 = arith.addi %27, %c3_i32 : i32
      %127 = arith.index_cast %126 : i32 to index
      %128 = memref.load %arg1[%127] : memref<33xi32, #tpu.memory_space<smem>>
      %c3_i32_62 = arith.constant 3 : i32
      %129 = arith.addi %27, %c3_i32_62 : i32
      %c1_i32_63 = arith.constant 1 : i32
      %130 = arith.addi %129, %c1_i32_63 : i32
      %131 = arith.index_cast %130 : i32 to index
      %132 = memref.load %arg1[%131] : memref<33xi32, #tpu.memory_space<smem>>
      %133 = arith.subi %132, %128 : i32
      %c0_i32_64 = arith.constant 0 : i32
      %134 = arith.cmpi sgt, %133, %c0_i32_64 : i32
      %135 = arith.extui %134 : i1 to i32
      %c0_i32_65 = arith.constant 0 : i32
      %136 = arith.cmpi ne, %135, %c0_i32_65 : i32
      scf.if %136 {
        %181 = arith.subi %128, %2 : i32
        %c3_i32_83 = arith.constant 3 : i32
        %182 = arith.addi %29, %c3_i32_83 : i32
        %183 = arith.index_cast %182 : i32 to index
        %c0 = arith.constant 0 : index
        %184 = vector.load %arg2[%183, %c0] : memref<16x8xf32, #tpu.memory_space<vmem>>, vector<1x8xf32>
        %185 = arith.index_cast %181 : i32 to index
        %c0_84 = arith.constant 0 : index
        %186 = vector.load %arg8[%185, %c0_84] : memref<16x8xf32, #tpu.memory_space<vmem>>, vector<1x8xf32>
        tpu.vector_store %arg8[%185, %c0_84], %184 {strides = array<i32>} : memref<16x8xf32, #tpu.memory_space<vmem>>, vector<1x8xf32>,
        %c3_i32_85 = arith.constant 3 : i32
        %187 = arith.addi %29, %c3_i32_85 : i32
        %188 = arith.index_cast %187 : i32 to index
        %c0_86 = arith.constant 0 : index
        %189 = vector.load %arg3[%188, %c0_86] : memref<16x4xi32, #tpu.memory_space<vmem>>, vector<1x4xi32>
        %190 = arith.index_cast %181 : i32 to index
        %c0_87 = arith.constant 0 : index
        %191 = vector.load %arg9[%190, %c0_87] : memref<16x4xi32, #tpu.memory_space<vmem>>, vector<1x4xi32>
        tpu.vector_store %arg9[%190, %c0_87], %189 {strides = array<i32>} : memref<16x4xi32, #tpu.memory_space<vmem>>, vector<1x4xi32>,
      } else {
      }
      %c4_i32_66 = arith.constant 4 : i32
      %137 = arith.addi %27, %c4_i32_66 : i32
      %138 = arith.index_cast %137 : i32 to index
      %139 = memref.load %arg1[%138] : memref<33xi32, #tpu.memory_space<smem>>
      %c4_i32_67 = arith.constant 4 : i32
      %140 = arith.addi %27, %c4_i32_67 : i32
      %c1_i32_68 = arith.constant 1 : i32
      %141 = arith.addi %140, %c1_i32_68 : i32
      %142 = arith.index_cast %141 : i32 to index
      %143 = memref.load %arg1[%142] : memref<33xi32, #tpu.memory_space<smem>>
      %144 = arith.subi %143, %139 : i32
      %c0_i32_69 = arith.constant 0 : i32
      %145 = arith.cmpi sgt, %144, %c0_i32_69 : i32
      %146 = arith.extui %145 : i1 to i32
      %c0_i32_70 = arith.constant 0 : i32
      %147 = arith.cmpi ne, %146, %c0_i32_70 : i32
      scf.if %147 {
        %181 = arith.subi %139, %2 : i32
        %c4_i32_83 = arith.constant 4 : i32
        %182 = arith.addi %29, %c4_i32_83 : i32
        %183 = arith.index_cast %182 : i32 to index
        %c0 = arith.constant 0 : index
        %184 = vector.load %arg2[%183, %c0] : memref<16x8xf32, #tpu.memory_space<vmem>>, vector<1x8xf32>
        %185 = arith.index_cast %181 : i32 to index
        %c0_84 = arith.constant 0 : index
        %186 = vector.load %arg8[%185, %c0_84] : memref<16x8xf32, #tpu.memory_space<vmem>>, vector<1x8xf32>
        tpu.vector_store %arg8[%185, %c0_84], %184 {strides = array<i32>} : memref<16x8xf32, #tpu.memory_space<vmem>>, vector<1x8xf32>,
        %c4_i32_85 = arith.constant 4 : i32
        %187 = arith.addi %29, %c4_i32_85 : i32
        %188 = arith.index_cast %187 : i32 to index
        %c0_86 = arith.constant 0 : index
        %189 = vector.load %arg3[%188, %c0_86] : memref<16x4xi32, #tpu.memory_space<vmem>>, vector<1x4xi32>
        %190 = arith.index_cast %181 : i32 to index
        %c0_87 = arith.constant 0 : index
        %191 = vector.load %arg9[%190, %c0_87] : memref<16x4xi32, #tpu.memory_space<vmem>>, vector<1x4xi32>
        tpu.vector_store %arg9[%190, %c0_87], %189 {strides = array<i32>} : memref<16x4xi32, #tpu.memory_space<vmem>>, vector<1x4xi32>,
      } else {
      }
      %c5_i32 = arith.constant 5 : i32
      %148 = arith.addi %27, %c5_i32 : i32
      %149 = arith.index_cast %148 : i32 to index
      %150 = memref.load %arg1[%149] : memref<33xi32, #tpu.memory_space<smem>>
      %c5_i32_71 = arith.constant 5 : i32
      %151 = arith.addi %27, %c5_i32_71 : i32
      %c1_i32_72 = arith.constant 1 : i32
      %152 = arith.addi %151, %c1_i32_72 : i32
      %153 = arith.index_cast %152 : i32 to index
      %154 = memref.load %arg1[%153] : memref<33xi32, #tpu.memory_space<smem>>
      %155 = arith.subi %154, %150 : i32
      %c0_i32_73 = arith.constant 0 : i32
      %156 = arith.cmpi sgt, %155, %c0_i32_73 : i32
      %157 = arith.extui %156 : i1 to i32
      %c0_i32_74 = arith.constant 0 : i32
      %158 = arith.cmpi ne, %157, %c0_i32_74 : i32
      scf.if %158 {
        %181 = arith.subi %150, %2 : i32
        %c5_i32_83 = arith.constant 5 : i32
        %182 = arith.addi %29, %c5_i32_83 : i32
        %183 = arith.index_cast %182 : i32 to index
        %c0 = arith.constant 0 : index
        %184 = vector.load %arg2[%183, %c0] : memref<16x8xf32, #tpu.memory_space<vmem>>, vector<1x8xf32>
        %185 = arith.index_cast %181 : i32 to index
        %c0_84 = arith.constant 0 : index
        %186 = vector.load %arg8[%185, %c0_84] : memref<16x8xf32, #tpu.memory_space<vmem>>, vector<1x8xf32>
        tpu.vector_store %arg8[%185, %c0_84], %184 {strides = array<i32>} : memref<16x8xf32, #tpu.memory_space<vmem>>, vector<1x8xf32>,
        %c5_i32_85 = arith.constant 5 : i32
        %187 = arith.addi %29, %c5_i32_85 : i32
        %188 = arith.index_cast %187 : i32 to index
        %c0_86 = arith.constant 0 : index
        %189 = vector.load %arg3[%188, %c0_86] : memref<16x4xi32, #tpu.memory_space<vmem>>, vector<1x4xi32>
        %190 = arith.index_cast %181 : i32 to index
        %c0_87 = arith.constant 0 : index
        %191 = vector.load %arg9[%190, %c0_87] : memref<16x4xi32, #tpu.memory_space<vmem>>, vector<1x4xi32>
        tpu.vector_store %arg9[%190, %c0_87], %189 {strides = array<i32>} : memref<16x4xi32, #tpu.memory_space<vmem>>, vector<1x4xi32>,
      } else {
      }
      %c6_i32 = arith.constant 6 : i32
      %159 = arith.addi %27, %c6_i32 : i32
      %160 = arith.index_cast %159 : i32 to index
      %161 = memref.load %arg1[%160] : memref<33xi32, #tpu.memory_space<smem>>
      %c6_i32_75 = arith.constant 6 : i32
      %162 = arith.addi %27, %c6_i32_75 : i32
      %c1_i32_76 = arith.constant 1 : i32
      %163 = arith.addi %162, %c1_i32_76 : i32
      %164 = arith.index_cast %163 : i32 to index
      %165 = memref.load %arg1[%164] : memref<33xi32, #tpu.memory_space<smem>>
      %166 = arith.subi %165, %161 : i32
      %c0_i32_77 = arith.constant 0 : i32
      %167 = arith.cmpi sgt, %166, %c0_i32_77 : i32
      %168 = arith.extui %167 : i1 to i32
      %c0_i32_78 = arith.constant 0 : i32
      %169 = arith.cmpi ne, %168, %c0_i32_78 : i32
      scf.if %169 {
        %181 = arith.subi %161, %2 : i32
        %c6_i32_83 = arith.constant 6 : i32
        %182 = arith.addi %29, %c6_i32_83 : i32
        %183 = arith.index_cast %182 : i32 to index
        %c0 = arith.constant 0 : index
        %184 = vector.load %arg2[%183, %c0] : memref<16x8xf32, #tpu.memory_space<vmem>>, vector<1x8xf32>
        %185 = arith.index_cast %181 : i32 to index
        %c0_84 = arith.constant 0 : index
        %186 = vector.load %arg8[%185, %c0_84] : memref<16x8xf32, #tpu.memory_space<vmem>>, vector<1x8xf32>
        tpu.vector_store %arg8[%185, %c0_84], %184 {strides = array<i32>} : memref<16x8xf32, #tpu.memory_space<vmem>>, vector<1x8xf32>,
        %c6_i32_85 = arith.constant 6 : i32
        %187 = arith.addi %29, %c6_i32_85 : i32
        %188 = arith.index_cast %187 : i32 to index
        %c0_86 = arith.constant 0 : index
        %189 = vector.load %arg3[%188, %c0_86] : memref<16x4xi32, #tpu.memory_space<vmem>>, vector<1x4xi32>
        %190 = arith.index_cast %181 : i32 to index
        %c0_87 = arith.constant 0 : index
        %191 = vector.load %arg9[%190, %c0_87] : memref<16x4xi32, #tpu.memory_space<vmem>>, vector<1x4xi32>
        tpu.vector_store %arg9[%190, %c0_87], %189 {strides = array<i32>} : memref<16x4xi32, #tpu.memory_space<vmem>>, vector<1x4xi32>,
      } else {
      }
      %c7_i32 = arith.constant 7 : i32
      %170 = arith.addi %27, %c7_i32 : i32
      %171 = arith.index_cast %170 : i32 to index
      %172 = memref.load %arg1[%171] : memref<33xi32, #tpu.memory_space<smem>>
      %c7_i32_79 = arith.constant 7 : i32
      %173 = arith.addi %27, %c7_i32_79 : i32
      %c1_i32_80 = arith.constant 1 : i32
      %174 = arith.addi %173, %c1_i32_80 : i32
      %175 = arith.index_cast %174 : i32 to index
      %176 = memref.load %arg1[%175] : memref<33xi32, #tpu.memory_space<smem>>
      %177 = arith.subi %176, %172 : i32
      %c0_i32_81 = arith.constant 0 : i32
      %178 = arith.cmpi sgt, %177, %c0_i32_81 : i32
      %179 = arith.extui %178 : i1 to i32
      %c0_i32_82 = arith.constant 0 : i32
      %180 = arith.cmpi ne, %179, %c0_i32_82 : i32
      scf.if %180 {
        %181 = arith.subi %172, %2 : i32
        %c7_i32_83 = arith.constant 7 : i32
        %182 = arith.addi %29, %c7_i32_83 : i32
        %183 = arith.index_cast %182 : i32 to index
        %c0 = arith.constant 0 : index
        %184 = vector.load %arg2[%183, %c0] : memref<16x8xf32, #tpu.memory_space<vmem>>, vector<1x8xf32>
        %185 = arith.index_cast %181 : i32 to index
        %c0_84 = arith.constant 0 : index
        %186 = vector.load %arg8[%185, %c0_84] : memref<16x8xf32, #tpu.memory_space<vmem>>, vector<1x8xf32>
        tpu.vector_store %arg8[%185, %c0_84], %184 {strides = array<i32>} : memref<16x8xf32, #tpu.memory_space<vmem>>, vector<1x8xf32>,
        %c7_i32_85 = arith.constant 7 : i32
        %187 = arith.addi %29, %c7_i32_85 : i32
        %188 = arith.index_cast %187 : i32 to index
        %c0_86 = arith.constant 0 : index
        %189 = vector.load %arg3[%188, %c0_86] : memref<16x4xi32, #tpu.memory_space<vmem>>, vector<1x4xi32>
        %190 = arith.index_cast %181 : i32 to index
        %c0_87 = arith.constant 0 : index
        %191 = vector.load %arg9[%190, %c0_87] : memref<16x4xi32, #tpu.memory_space<vmem>>, vector<1x4xi32>
        tpu.vector_store %arg9[%190, %c0_87], %189 {strides = array<i32>} : memref<16x4xi32, #tpu.memory_space<vmem>>, vector<1x4xi32>,
      } else {
      }
    } else {
    }
    %c2_i32 = arith.constant 2 : i32
    %c16_i32_16 = arith.constant 16 : i32
    %45 = arith.andi %6, %c16_i32_16 : i32
    %c0_i32_17 = arith.constant 0 : i32
    %46 = arith.cmpi sgt, %45, %c0_i32_17 : i32
    %47 = arith.extui %46 : i1 to i32
    %c0_i32_18 = arith.constant 0 : i32
    %48 = arith.cmpi ne, %47, %c0_i32_18 : i32
    scf.if %48 {
      %c0_i32_47 = arith.constant 0 : i32
      %93 = arith.addi %2, %c0_i32_47 : i32
      %c0_i32_48 = arith.constant 0 : i32
      %94 = arith.addi %2, %c0_i32_48 : i32
      %c0_i32_49 = arith.constant 0 : i32
      %c0_i32_50 = arith.constant 0 : i32
      %c0_i32_51 = arith.constant 0 : i32
      %95 = tpu.memref_slice %arg8[%c0_i32_50, %c0_i32_51] : memref<16x8xf32, #tpu.memory_space<vmem>> -> memref<16x8xf32, #tpu.memory_space<vmem>>
      %c0_i32_52 = arith.constant 0 : i32
      %96 = tpu.memref_slice %arg6[%93, %c0_i32_52] : memref<32x8xf32, #tpu.memory_space<any>> -> memref<16x8xf32, #tpu.memory_space<any>>
      %97 = tpu.memref_slice %arg10[%c0_i32_49] : memref<2x!tpu.dma_semaphore, #tpu.memory_space<semaphore_mem>> -> memref<1x!tpu.dma_semaphore, #tpu.memory_space<semaphore_mem>>
      %98 = tpu.memref_squeeze %97 : memref<1x!tpu.dma_semaphore, #tpu.memory_space<semaphore_mem>> -> memref<!tpu.dma_semaphore, #tpu.memory_space<semaphore_mem>>
      tpu.enqueue_dma source(%95 : memref<16x8xf32, #tpu.memory_space<vmem>>) target(%96 : memref<16x8xf32, #tpu.memory_space<any>>) target_semaphore(%98 : memref<!tpu.dma_semaphore, #tpu.memory_space<semaphore_mem>>)
      %c1_i32_53 = arith.constant 1 : i32
      %c0_i32_54 = arith.constant 0 : i32
      %c0_i32_55 = arith.constant 0 : i32
      %99 = tpu.memref_slice %arg9[%c0_i32_54, %c0_i32_55] : memref<16x4xi32, #tpu.memory_space<vmem>> -> memref<16x4xi32, #tpu.memory_space<vmem>>
      %c0_i32_56 = arith.constant 0 : i32
      %100 = tpu.memref_slice %arg7[%94, %c0_i32_56] : memref<32x4xi32, #tpu.memory_space<any>> -> memref<16x4xi32, #tpu.memory_space<any>>
      %101 = tpu.memref_slice %arg10[%c1_i32_53] : memref<2x!tpu.dma_semaphore, #tpu.memory_space<semaphore_mem>> -> memref<1x!tpu.dma_semaphore, #tpu.memory_space<semaphore_mem>>
      %102 = tpu.memref_squeeze %101 : memref<1x!tpu.dma_semaphore, #tpu.memory_space<semaphore_mem>> -> memref<!tpu.dma_semaphore, #tpu.memory_space<semaphore_mem>>
      tpu.enqueue_dma source(%99 : memref<16x4xi32, #tpu.memory_space<vmem>>) target(%100 : memref<16x4xi32, #tpu.memory_space<any>>) target_semaphore(%102 : memref<!tpu.dma_semaphore, #tpu.memory_space<semaphore_mem>>)
    } else {
    }
    %c0_i32_19 = arith.constant 0 : i32
    %49 = arith.addi %c0_i32_19, %45 : i32
    %c8_i32_20 = arith.constant 8 : i32
    %50 = arith.andi %6, %c8_i32_20 : i32
    %c0_i32_21 = arith.constant 0 : i32
    %51 = arith.cmpi sgt, %50, %c0_i32_21 : i32
    %52 = arith.extui %51 : i1 to i32
    %c0_i32_22 = arith.constant 0 : i32
    %53 = arith.cmpi ne, %52, %c0_i32_22 : i32
    scf.if %53 {
      %93 = arith.addi %2, %49 : i32
      %94 = arith.addi %2, %49 : i32
      %c0_i32_47 = arith.constant 0 : i32
      %c0_i32_48 = arith.constant 0 : i32
      %95 = tpu.memref_slice %arg8[%49, %c0_i32_48] : memref<16x8xf32, #tpu.memory_space<vmem>> -> memref<8x8xf32, #tpu.memory_space<vmem>>
      %c0_i32_49 = arith.constant 0 : i32
      %96 = tpu.memref_slice %arg6[%93, %c0_i32_49] : memref<32x8xf32, #tpu.memory_space<any>> -> memref<8x8xf32, #tpu.memory_space<any>>
      %97 = tpu.memref_slice %arg10[%c0_i32_47] : memref<2x!tpu.dma_semaphore, #tpu.memory_space<semaphore_mem>> -> memref<1x!tpu.dma_semaphore, #tpu.memory_space<semaphore_mem>>
      %98 = tpu.memref_squeeze %97 : memref<1x!tpu.dma_semaphore, #tpu.memory_space<semaphore_mem>> -> memref<!tpu.dma_semaphore, #tpu.memory_space<semaphore_mem>>
      tpu.enqueue_dma source(%95 : memref<8x8xf32, #tpu.memory_space<vmem>>) target(%96 : memref<8x8xf32, #tpu.memory_space<any>>) target_semaphore(%98 : memref<!tpu.dma_semaphore, #tpu.memory_space<semaphore_mem>>)
      %c1_i32_50 = arith.constant 1 : i32
      %c0_i32_51 = arith.constant 0 : i32
      %99 = tpu.memref_slice %arg9[%49, %c0_i32_51] : memref<16x4xi32, #tpu.memory_space<vmem>> -> memref<8x4xi32, #tpu.memory_space<vmem>>
      %c0_i32_52 = arith.constant 0 : i32
      %100 = tpu.memref_slice %arg7[%94, %c0_i32_52] : memref<32x4xi32, #tpu.memory_space<any>> -> memref<8x4xi32, #tpu.memory_space<any>>
      %101 = tpu.memref_slice %arg10[%c1_i32_50] : memref<2x!tpu.dma_semaphore, #tpu.memory_space<semaphore_mem>> -> memref<1x!tpu.dma_semaphore, #tpu.memory_space<semaphore_mem>>
      %102 = tpu.memref_squeeze %101 : memref<1x!tpu.dma_semaphore, #tpu.memory_space<semaphore_mem>> -> memref<!tpu.dma_semaphore, #tpu.memory_space<semaphore_mem>>
      tpu.enqueue_dma source(%99 : memref<8x4xi32, #tpu.memory_space<vmem>>) target(%100 : memref<8x4xi32, #tpu.memory_space<any>>) target_semaphore(%102 : memref<!tpu.dma_semaphore, #tpu.memory_space<semaphore_mem>>)
    } else {
    }
    %54 = arith.addi %49, %50 : i32
    %c4_i32 = arith.constant 4 : i32
    %55 = arith.andi %6, %c4_i32 : i32
    %c0_i32_23 = arith.constant 0 : i32
    %56 = arith.cmpi sgt, %55, %c0_i32_23 : i32
    %57 = arith.extui %56 : i1 to i32
    %c0_i32_24 = arith.constant 0 : i32
    %58 = arith.cmpi ne, %57, %c0_i32_24 : i32
    scf.if %58 {
      %93 = arith.addi %2, %54 : i32
      %94 = arith.addi %2, %54 : i32
      %c0_i32_47 = arith.constant 0 : i32
      %c0_i32_48 = arith.constant 0 : i32
      %95 = tpu.memref_slice %arg8[%54, %c0_i32_48] : memref<16x8xf32, #tpu.memory_space<vmem>> -> memref<4x8xf32, #tpu.memory_space<vmem>>
      %c0_i32_49 = arith.constant 0 : i32
      %96 = tpu.memref_slice %arg6[%93, %c0_i32_49] : memref<32x8xf32, #tpu.memory_space<any>> -> memref<4x8xf32, #tpu.memory_space<any>>
      %97 = tpu.memref_slice %arg10[%c0_i32_47] : memref<2x!tpu.dma_semaphore, #tpu.memory_space<semaphore_mem>> -> memref<1x!tpu.dma_semaphore, #tpu.memory_space<semaphore_mem>>
      %98 = tpu.memref_squeeze %97 : memref<1x!tpu.dma_semaphore, #tpu.memory_space<semaphore_mem>> -> memref<!tpu.dma_semaphore, #tpu.memory_space<semaphore_mem>>
      tpu.enqueue_dma source(%95 : memref<4x8xf32, #tpu.memory_space<vmem>>) target(%96 : memref<4x8xf32, #tpu.memory_space<any>>) target_semaphore(%98 : memref<!tpu.dma_semaphore, #tpu.memory_space<semaphore_mem>>)
      %c1_i32_50 = arith.constant 1 : i32
      %c0_i32_51 = arith.constant 0 : i32
      %99 = tpu.memref_slice %arg9[%54, %c0_i32_51] : memref<16x4xi32, #tpu.memory_space<vmem>> -> memref<4x4xi32, #tpu.memory_space<vmem>>
      %c0_i32_52 = arith.constant 0 : i32
      %100 = tpu.memref_slice %arg7[%94, %c0_i32_52] : memref<32x4xi32, #tpu.memory_space<any>> -> memref<4x4xi32, #tpu.memory_space<any>>
      %101 = tpu.memref_slice %arg10[%c1_i32_50] : memref<2x!tpu.dma_semaphore, #tpu.memory_space<semaphore_mem>> -> memref<1x!tpu.dma_semaphore, #tpu.memory_space<semaphore_mem>>
      %102 = tpu.memref_squeeze %101 : memref<1x!tpu.dma_semaphore, #tpu.memory_space<semaphore_mem>> -> memref<!tpu.dma_semaphore, #tpu.memory_space<semaphore_mem>>
      tpu.enqueue_dma source(%99 : memref<4x4xi32, #tpu.memory_space<vmem>>) target(%100 : memref<4x4xi32, #tpu.memory_space<any>>) target_semaphore(%102 : memref<!tpu.dma_semaphore, #tpu.memory_space<semaphore_mem>>)
    } else {
    }
    %59 = arith.addi %54, %55 : i32
    %c2_i32_25 = arith.constant 2 : i32
    %60 = arith.andi %6, %c2_i32_25 : i32
    %c0_i32_26 = arith.constant 0 : i32
    %61 = arith.cmpi sgt, %60, %c0_i32_26 : i32
    %62 = arith.extui %61 : i1 to i32
    %c0_i32_27 = arith.constant 0 : i32
    %63 = arith.cmpi ne, %62, %c0_i32_27 : i32
    scf.if %63 {
      %93 = arith.addi %2, %59 : i32
      %94 = arith.addi %2, %59 : i32
      %c0_i32_47 = arith.constant 0 : i32
      %c0_i32_48 = arith.constant 0 : i32
      %95 = tpu.memref_slice %arg8[%59, %c0_i32_48] : memref<16x8xf32, #tpu.memory_space<vmem>> -> memref<2x8xf32, #tpu.memory_space<vmem>>
      %c0_i32_49 = arith.constant 0 : i32
      %96 = tpu.memref_slice %arg6[%93, %c0_i32_49] : memref<32x8xf32, #tpu.memory_space<any>> -> memref<2x8xf32, #tpu.memory_space<any>>
      %97 = tpu.memref_slice %arg10[%c0_i32_47] : memref<2x!tpu.dma_semaphore, #tpu.memory_space<semaphore_mem>> -> memref<1x!tpu.dma_semaphore, #tpu.memory_space<semaphore_mem>>
      %98 = tpu.memref_squeeze %97 : memref<1x!tpu.dma_semaphore, #tpu.memory_space<semaphore_mem>> -> memref<!tpu.dma_semaphore, #tpu.memory_space<semaphore_mem>>
      tpu.enqueue_dma source(%95 : memref<2x8xf32, #tpu.memory_space<vmem>>) target(%96 : memref<2x8xf32, #tpu.memory_space<any>>) target_semaphore(%98 : memref<!tpu.dma_semaphore, #tpu.memory_space<semaphore_mem>>)
      %c1_i32_50 = arith.constant 1 : i32
      %c0_i32_51 = arith.constant 0 : i32
      %99 = tpu.memref_slice %arg9[%59, %c0_i32_51] : memref<16x4xi32, #tpu.memory_space<vmem>> -> memref<2x4xi32, #tpu.memory_space<vmem>>
      %c0_i32_52 = arith.constant 0 : i32
      %100 = tpu.memref_slice %arg7[%94, %c0_i32_52] : memref<32x4xi32, #tpu.memory_space<any>> -> memref<2x4xi32, #tpu.memory_space<any>>
      %101 = tpu.memref_slice %arg10[%c1_i32_50] : memref<2x!tpu.dma_semaphore, #tpu.memory_space<semaphore_mem>> -> memref<1x!tpu.dma_semaphore, #tpu.memory_space<semaphore_mem>>
      %102 = tpu.memref_squeeze %101 : memref<1x!tpu.dma_semaphore, #tpu.memory_space<semaphore_mem>> -> memref<!tpu.dma_semaphore, #tpu.memory_space<semaphore_mem>>
      tpu.enqueue_dma source(%99 : memref<2x4xi32, #tpu.memory_space<vmem>>) target(%100 : memref<2x4xi32, #tpu.memory_space<any>>) target_semaphore(%102 : memref<!tpu.dma_semaphore, #tpu.memory_space<semaphore_mem>>)
    } else {
    }
    %64 = arith.addi %59, %60 : i32
    %c1_i32_28 = arith.constant 1 : i32
    %65 = arith.andi %6, %c1_i32_28 : i32
    %c0_i32_29 = arith.constant 0 : i32
    %66 = arith.cmpi sgt, %65, %c0_i32_29 : i32
    %67 = arith.extui %66 : i1 to i32
    %c0_i32_30 = arith.constant 0 : i32
    %68 = arith.cmpi ne, %67, %c0_i32_30 : i32
    scf.if %68 {
      %93 = arith.addi %2, %64 : i32
      %94 = arith.addi %2, %64 : i32
      %c0_i32_47 = arith.constant 0 : i32
      %c0_i32_48 = arith.constant 0 : i32
      %95 = tpu.memref_slice %arg8[%64, %c0_i32_48] : memref<16x8xf32, #tpu.memory_space<vmem>> -> memref<1x8xf32, #tpu.memory_space<vmem>>
      %c0_i32_49 = arith.constant 0 : i32
      %96 = tpu.memref_slice %arg6[%93, %c0_i32_49] : memref<32x8xf32, #tpu.memory_space<any>> -> memref<1x8xf32, #tpu.memory_space<any>>
      %97 = tpu.memref_slice %arg10[%c0_i32_47] : memref<2x!tpu.dma_semaphore, #tpu.memory_space<semaphore_mem>> -> memref<1x!tpu.dma_semaphore, #tpu.memory_space<semaphore_mem>>
      %98 = tpu.memref_squeeze %97 : memref<1x!tpu.dma_semaphore, #tpu.memory_space<semaphore_mem>> -> memref<!tpu.dma_semaphore, #tpu.memory_space<semaphore_mem>>
      tpu.enqueue_dma source(%95 : memref<1x8xf32, #tpu.memory_space<vmem>>) target(%96 : memref<1x8xf32, #tpu.memory_space<any>>) target_semaphore(%98 : memref<!tpu.dma_semaphore, #tpu.memory_space<semaphore_mem>>)
      %c1_i32_50 = arith.constant 1 : i32
      %c0_i32_51 = arith.constant 0 : i32
      %99 = tpu.memref_slice %arg9[%64, %c0_i32_51] : memref<16x4xi32, #tpu.memory_space<vmem>> -> memref<1x4xi32, #tpu.memory_space<vmem>>
      %c0_i32_52 = arith.constant 0 : i32
      %100 = tpu.memref_slice %arg7[%94, %c0_i32_52] : memref<32x4xi32, #tpu.memory_space<any>> -> memref<1x4xi32, #tpu.memory_space<any>>
      %101 = tpu.memref_slice %arg10[%c1_i32_50] : memref<2x!tpu.dma_semaphore, #tpu.memory_space<semaphore_mem>> -> memref<1x!tpu.dma_semaphore, #tpu.memory_space<semaphore_mem>>
      %102 = tpu.memref_squeeze %101 : memref<1x!tpu.dma_semaphore, #tpu.memory_space<semaphore_mem>> -> memref<!tpu.dma_semaphore, #tpu.memory_space<semaphore_mem>>
      tpu.enqueue_dma source(%99 : memref<1x4xi32, #tpu.memory_space<vmem>>) target(%100 : memref<1x4xi32, #tpu.memory_space<any>>) target_semaphore(%102 : memref<!tpu.dma_semaphore, #tpu.memory_space<semaphore_mem>>)
    } else {
    }
    %c16_i32_31 = arith.constant 16 : i32
    %69 = arith.andi %6, %c16_i32_31 : i32
    %c0_i32_32 = arith.constant 0 : i32
    %70 = arith.cmpi sgt, %69, %c0_i32_32 : i32
    %71 = arith.extui %70 : i1 to i32
    %c0_i32_33 = arith.constant 0 : i32
    %72 = arith.cmpi ne, %71, %c0_i32_33 : i32
    scf.if %72 {
      %c0_i32_47 = arith.constant 0 : i32
      %93 = arith.addi %2, %c0_i32_47 : i32
      %c0_i32_48 = arith.constant 0 : i32
      %94 = arith.addi %2, %c0_i32_48 : i32
      %c0_i32_49 = arith.constant 0 : i32
      %c0_i32_50 = arith.constant 0 : i32
      %c0_i32_51 = arith.constant 0 : i32
      %95 = tpu.memref_slice %arg8[%c0_i32_50, %c0_i32_51] : memref<16x8xf32, #tpu.memory_space<vmem>> -> memref<16x8xf32, #tpu.memory_space<vmem>>
      %c0_i32_52 = arith.constant 0 : i32
      %96 = tpu.memref_slice %arg6[%93, %c0_i32_52] : memref<32x8xf32, #tpu.memory_space<any>> -> memref<16x8xf32, #tpu.memory_space<any>>
      %97 = tpu.memref_slice %arg10[%c0_i32_49] : memref<2x!tpu.dma_semaphore, #tpu.memory_space<semaphore_mem>> -> memref<1x!tpu.dma_semaphore, #tpu.memory_space<semaphore_mem>>
      %98 = tpu.memref_squeeze %97 : memref<1x!tpu.dma_semaphore, #tpu.memory_space<semaphore_mem>> -> memref<!tpu.dma_semaphore, #tpu.memory_space<semaphore_mem>>
      tpu.wait_dma2 semaphore(%98 : memref<!tpu.dma_semaphore, #tpu.memory_space<semaphore_mem>>) src(%95 : memref<16x8xf32, #tpu.memory_space<vmem>>) dst(%96 : memref<16x8xf32, #tpu.memory_space<any>>)
      %c1_i32_53 = arith.constant 1 : i32
      %c0_i32_54 = arith.constant 0 : i32
      %c0_i32_55 = arith.constant 0 : i32
      %99 = tpu.memref_slice %arg9[%c0_i32_54, %c0_i32_55] : memref<16x4xi32, #tpu.memory_space<vmem>> -> memref<16x4xi32, #tpu.memory_space<vmem>>
      %c0_i32_56 = arith.constant 0 : i32
      %100 = tpu.memref_slice %arg7[%94, %c0_i32_56] : memref<32x4xi32, #tpu.memory_space<any>> -> memref<16x4xi32, #tpu.memory_space<any>>
      %101 = tpu.memref_slice %arg10[%c1_i32_53] : memref<2x!tpu.dma_semaphore, #tpu.memory_space<semaphore_mem>> -> memref<1x!tpu.dma_semaphore, #tpu.memory_space<semaphore_mem>>
      %102 = tpu.memref_squeeze %101 : memref<1x!tpu.dma_semaphore, #tpu.memory_space<semaphore_mem>> -> memref<!tpu.dma_semaphore, #tpu.memory_space<semaphore_mem>>
      tpu.wait_dma2 semaphore(%102 : memref<!tpu.dma_semaphore, #tpu.memory_space<semaphore_mem>>) src(%99 : memref<16x4xi32, #tpu.memory_space<vmem>>) dst(%100 : memref<16x4xi32, #tpu.memory_space<any>>)
    } else {
    }
    %c0_i32_34 = arith.constant 0 : i32
    %73 = arith.addi %c0_i32_34, %69 : i32
    %c8_i32_35 = arith.constant 8 : i32
    %74 = arith.andi %6, %c8_i32_35 : i32
    %c0_i32_36 = arith.constant 0 : i32
    %75 = arith.cmpi sgt, %74, %c0_i32_36 : i32
    %76 = arith.extui %75 : i1 to i32
    %c0_i32_37 = arith.constant 0 : i32
    %77 = arith.cmpi ne, %76, %c0_i32_37 : i32
    scf.if %77 {
      %93 = arith.addi %2, %73 : i32
      %94 = arith.addi %2, %73 : i32
      %c0_i32_47 = arith.constant 0 : i32
      %c0_i32_48 = arith.constant 0 : i32
      %95 = tpu.memref_slice %arg8[%73, %c0_i32_48] : memref<16x8xf32, #tpu.memory_space<vmem>> -> memref<8x8xf32, #tpu.memory_space<vmem>>
      %c0_i32_49 = arith.constant 0 : i32
      %96 = tpu.memref_slice %arg6[%93, %c0_i32_49] : memref<32x8xf32, #tpu.memory_space<any>> -> memref<8x8xf32, #tpu.memory_space<any>>
      %97 = tpu.memref_slice %arg10[%c0_i32_47] : memref<2x!tpu.dma_semaphore, #tpu.memory_space<semaphore_mem>> -> memref<1x!tpu.dma_semaphore, #tpu.memory_space<semaphore_mem>>
      %98 = tpu.memref_squeeze %97 : memref<1x!tpu.dma_semaphore, #tpu.memory_space<semaphore_mem>> -> memref<!tpu.dma_semaphore, #tpu.memory_space<semaphore_mem>>
      tpu.wait_dma2 semaphore(%98 : memref<!tpu.dma_semaphore, #tpu.memory_space<semaphore_mem>>) src(%95 : memref<8x8xf32, #tpu.memory_space<vmem>>) dst(%96 : memref<8x8xf32, #tpu.memory_space<any>>)
      %c1_i32_50 = arith.constant 1 : i32
      %c0_i32_51 = arith.constant 0 : i32
      %99 = tpu.memref_slice %arg9[%73, %c0_i32_51] : memref<16x4xi32, #tpu.memory_space<vmem>> -> memref<8x4xi32, #tpu.memory_space<vmem>>
      %c0_i32_52 = arith.constant 0 : i32
      %100 = tpu.memref_slice %arg7[%94, %c0_i32_52] : memref<32x4xi32, #tpu.memory_space<any>> -> memref<8x4xi32, #tpu.memory_space<any>>
      %101 = tpu.memref_slice %arg10[%c1_i32_50] : memref<2x!tpu.dma_semaphore, #tpu.memory_space<semaphore_mem>> -> memref<1x!tpu.dma_semaphore, #tpu.memory_space<semaphore_mem>>
      %102 = tpu.memref_squeeze %101 : memref<1x!tpu.dma_semaphore, #tpu.memory_space<semaphore_mem>> -> memref<!tpu.dma_semaphore, #tpu.memory_space<semaphore_mem>>
      tpu.wait_dma2 semaphore(%102 : memref<!tpu.dma_semaphore, #tpu.memory_space<semaphore_mem>>) src(%99 : memref<8x4xi32, #tpu.memory_space<vmem>>) dst(%100 : memref<8x4xi32, #tpu.memory_space<any>>)
    } else {
    }
    %78 = arith.addi %73, %74 : i32
    %c4_i32_38 = arith.constant 4 : i32
    %79 = arith.andi %6, %c4_i32_38 : i32
    %c0_i32_39 = arith.constant 0 : i32
    %80 = arith.cmpi sgt, %79, %c0_i32_39 : i32
    %81 = arith.extui %80 : i1 to i32
    %c0_i32_40 = arith.constant 0 : i32
    %82 = arith.cmpi ne, %81, %c0_i32_40 : i32
    scf.if %82 {
      %93 = arith.addi %2, %78 : i32
      %94 = arith.addi %2, %78 : i32
      %c0_i32_47 = arith.constant 0 : i32
      %c0_i32_48 = arith.constant 0 : i32
      %95 = tpu.memref_slice %arg8[%78, %c0_i32_48] : memref<16x8xf32, #tpu.memory_space<vmem>> -> memref<4x8xf32, #tpu.memory_space<vmem>>
      %c0_i32_49 = arith.constant 0 : i32
      %96 = tpu.memref_slice %arg6[%93, %c0_i32_49] : memref<32x8xf32, #tpu.memory_space<any>> -> memref<4x8xf32, #tpu.memory_space<any>>
      %97 = tpu.memref_slice %arg10[%c0_i32_47] : memref<2x!tpu.dma_semaphore, #tpu.memory_space<semaphore_mem>> -> memref<1x!tpu.dma_semaphore, #tpu.memory_space<semaphore_mem>>
      %98 = tpu.memref_squeeze %97 : memref<1x!tpu.dma_semaphore, #tpu.memory_space<semaphore_mem>> -> memref<!tpu.dma_semaphore, #tpu.memory_space<semaphore_mem>>
      tpu.wait_dma2 semaphore(%98 : memref<!tpu.dma_semaphore, #tpu.memory_space<semaphore_mem>>) src(%95 : memref<4x8xf32, #tpu.memory_space<vmem>>) dst(%96 : memref<4x8xf32, #tpu.memory_space<any>>)
      %c1_i32_50 = arith.constant 1 : i32
      %c0_i32_51 = arith.constant 0 : i32
      %99 = tpu.memref_slice %arg9[%78, %c0_i32_51] : memref<16x4xi32, #tpu.memory_space<vmem>> -> memref<4x4xi32, #tpu.memory_space<vmem>>
      %c0_i32_52 = arith.constant 0 : i32
      %100 = tpu.memref_slice %arg7[%94, %c0_i32_52] : memref<32x4xi32, #tpu.memory_space<any>> -> memref<4x4xi32, #tpu.memory_space<any>>
      %101 = tpu.memref_slice %arg10[%c1_i32_50] : memref<2x!tpu.dma_semaphore, #tpu.memory_space<semaphore_mem>> -> memref<1x!tpu.dma_semaphore, #tpu.memory_space<semaphore_mem>>
      %102 = tpu.memref_squeeze %101 : memref<1x!tpu.dma_semaphore, #tpu.memory_space<semaphore_mem>> -> memref<!tpu.dma_semaphore, #tpu.memory_space<semaphore_mem>>
      tpu.wait_dma2 semaphore(%102 : memref<!tpu.dma_semaphore, #tpu.memory_space<semaphore_mem>>) src(%99 : memref<4x4xi32, #tpu.memory_space<vmem>>) dst(%100 : memref<4x4xi32, #tpu.memory_space<any>>)
    } else {
    }
    %83 = arith.addi %78, %79 : i32
    %c2_i32_41 = arith.constant 2 : i32
    %84 = arith.andi %6, %c2_i32_41 : i32
    %c0_i32_42 = arith.constant 0 : i32
    %85 = arith.cmpi sgt, %84, %c0_i32_42 : i32
    %86 = arith.extui %85 : i1 to i32
    %c0_i32_43 = arith.constant 0 : i32
    %87 = arith.cmpi ne, %86, %c0_i32_43 : i32
    scf.if %87 {
      %93 = arith.addi %2, %83 : i32
      %94 = arith.addi %2, %83 : i32
      %c0_i32_47 = arith.constant 0 : i32
      %c0_i32_48 = arith.constant 0 : i32
      %95 = tpu.memref_slice %arg8[%83, %c0_i32_48] : memref<16x8xf32, #tpu.memory_space<vmem>> -> memref<2x8xf32, #tpu.memory_space<vmem>>
      %c0_i32_49 = arith.constant 0 : i32
      %96 = tpu.memref_slice %arg6[%93, %c0_i32_49] : memref<32x8xf32, #tpu.memory_space<any>> -> memref<2x8xf32, #tpu.memory_space<any>>
      %97 = tpu.memref_slice %arg10[%c0_i32_47] : memref<2x!tpu.dma_semaphore, #tpu.memory_space<semaphore_mem>> -> memref<1x!tpu.dma_semaphore, #tpu.memory_space<semaphore_mem>>
      %98 = tpu.memref_squeeze %97 : memref<1x!tpu.dma_semaphore, #tpu.memory_space<semaphore_mem>> -> memref<!tpu.dma_semaphore, #tpu.memory_space<semaphore_mem>>
      tpu.wait_dma2 semaphore(%98 : memref<!tpu.dma_semaphore, #tpu.memory_space<semaphore_mem>>) src(%95 : memref<2x8xf32, #tpu.memory_space<vmem>>) dst(%96 : memref<2x8xf32, #tpu.memory_space<any>>)
      %c1_i32_50 = arith.constant 1 : i32
      %c0_i32_51 = arith.constant 0 : i32
      %99 = tpu.memref_slice %arg9[%83, %c0_i32_51] : memref<16x4xi32, #tpu.memory_space<vmem>> -> memref<2x4xi32, #tpu.memory_space<vmem>>
      %c0_i32_52 = arith.constant 0 : i32
      %100 = tpu.memref_slice %arg7[%94, %c0_i32_52] : memref<32x4xi32, #tpu.memory_space<any>> -> memref<2x4xi32, #tpu.memory_space<any>>
      %101 = tpu.memref_slice %arg10[%c1_i32_50] : memref<2x!tpu.dma_semaphore, #tpu.memory_space<semaphore_mem>> -> memref<1x!tpu.dma_semaphore, #tpu.memory_space<semaphore_mem>>
      %102 = tpu.memref_squeeze %101 : memref<1x!tpu.dma_semaphore, #tpu.memory_space<semaphore_mem>> -> memref<!tpu.dma_semaphore, #tpu.memory_space<semaphore_mem>>
      tpu.wait_dma2 semaphore(%102 : memref<!tpu.dma_semaphore, #tpu.memory_space<semaphore_mem>>) src(%99 : memref<2x4xi32, #tpu.memory_space<vmem>>) dst(%100 : memref<2x4xi32, #tpu.memory_space<any>>)
    } else {
    }
    %88 = arith.addi %83, %84 : i32
    %c1_i32_44 = arith.constant 1 : i32
    %89 = arith.andi %6, %c1_i32_44 : i32
    %c0_i32_45 = arith.constant 0 : i32
    %90 = arith.cmpi sgt, %89, %c0_i32_45 : i32
    %91 = arith.extui %90 : i1 to i32
    %c0_i32_46 = arith.constant 0 : i32
    %92 = arith.cmpi ne, %91, %c0_i32_46 : i32
    scf.if %92 {
      %93 = arith.addi %2, %88 : i32
      %94 = arith.addi %2, %88 : i32
      %c0_i32_47 = arith.constant 0 : i32
      %c0_i32_48 = arith.constant 0 : i32
      %95 = tpu.memref_slice %arg8[%88, %c0_i32_48] : memref<16x8xf32, #tpu.memory_space<vmem>> -> memref<1x8xf32, #tpu.memory_space<vmem>>
      %c0_i32_49 = arith.constant 0 : i32
      %96 = tpu.memref_slice %arg6[%93, %c0_i32_49] : memref<32x8xf32, #tpu.memory_space<any>> -> memref<1x8xf32, #tpu.memory_space<any>>
      %97 = tpu.memref_slice %arg10[%c0_i32_47] : memref<2x!tpu.dma_semaphore, #tpu.memory_space<semaphore_mem>> -> memref<1x!tpu.dma_semaphore, #tpu.memory_space<semaphore_mem>>
      %98 = tpu.memref_squeeze %97 : memref<1x!tpu.dma_semaphore, #tpu.memory_space<semaphore_mem>> -> memref<!tpu.dma_semaphore, #tpu.memory_space<semaphore_mem>>
      tpu.wait_dma2 semaphore(%98 : memref<!tpu.dma_semaphore, #tpu.memory_space<semaphore_mem>>) src(%95 : memref<1x8xf32, #tpu.memory_space<vmem>>) dst(%96 : memref<1x8xf32, #tpu.memory_space<any>>)
      %c1_i32_50 = arith.constant 1 : i32
      %c0_i32_51 = arith.constant 0 : i32
      %99 = tpu.memref_slice %arg9[%88, %c0_i32_51] : memref<16x4xi32, #tpu.memory_space<vmem>> -> memref<1x4xi32, #tpu.memory_space<vmem>>
      %c0_i32_52 = arith.constant 0 : i32
      %100 = tpu.memref_slice %arg7[%94, %c0_i32_52] : memref<32x4xi32, #tpu.memory_space<any>> -> memref<1x4xi32, #tpu.memory_space<any>>
      %101 = tpu.memref_slice %arg10[%c1_i32_50] : memref<2x!tpu.dma_semaphore, #tpu.memory_space<semaphore_mem>> -> memref<1x!tpu.dma_semaphore, #tpu.memory_space<semaphore_mem>>
      %102 = tpu.memref_squeeze %101 : memref<1x!tpu.dma_semaphore, #tpu.memory_space<semaphore_mem>> -> memref<!tpu.dma_semaphore, #tpu.memory_space<semaphore_mem>>
      tpu.wait_dma2 semaphore(%102 : memref<!tpu.dma_semaphore, #tpu.memory_space<semaphore_mem>>) src(%99 : memref<1x4xi32, #tpu.memory_space<vmem>>) dst(%100 : memref<1x4xi32, #tpu.memory_space<any>>)
    } else {
    }
    return
  }
  func.func @transform_0(%arg0: i32, %arg1: memref<33xi32, #tpu.memory_space<smem>>) -> (i32, i32) {
    %c0_i32 = arith.constant 0 : i32
    %c0_i32_0 = arith.constant 0 : i32
    return %arg0, %c0_i32 : i32, i32
  }
  func.func @transform_1(%arg0: i32, %arg1: memref<33xi32, #tpu.memory_space<smem>>) -> (i32, i32) {
    %c0_i32 = arith.constant 0 : i32
    %c0_i32_0 = arith.constant 0 : i32
    return %arg0, %c0_i32 : i32, i32
  }
}

</mosaic_0001>

<llo_original>
// kernel: _minkowski_pruning_impl.1
$region0: #{_minkowski_pruning_impl.1}
  #allocation0 [shape = 'u32[]', space=smem, size = 0x4, offset = 0x4, fixed_abs, tag = 'smem constant byte address 0x4 - core index']
  #allocation1 [shape = 'u32[144,128]{1,0:T(1,128)}', space=vmem, size = 0x12000, scoped, tag = 'internal scratch']
  #allocation2 [shape = 'f32[16,8]{1,0:T(8,128)}', space=vmem, size = 0x2000, scoped, tag = 'scratch operand']
  #allocation3 [shape = 's32[16,4]{1,0:T(8,128)}', space=vmem, size = 0x2000, scoped, tag = 'scratch operand']
  #allocation4 [shape = 's32[2]{0}', space=sflag, size = 0x8, scoped, tag = 'scratch operand']
  #allocation5 [shape = 's32[1]{0}', space=sflag, size = 0x4, scoped, tag = 'scoped memory for _minkowski_pruning_impl.1']
  #allocation6 [shape = 'u8[512]{0}', space=smem, size = 0x200, scoped, tag = 'prefetched SMEM operand 0']
  #allocation7 [shape = 's32[]', space=sflag, size = 0x4, offset = 0, fixed_abs, tag = 'sflag constant byte address 0x0 - dummy sync flag']
  #allocation8 [shape = 's32[]', space=sflag, size = 0x4, offset = 0, fixed_abs, tag = 'sflag constant byte address 0x0 - dummy sync flag']
  #allocation9 [shape = 's32[]', space=sflag, size = 0x4, offset = 0, fixed_abs, tag = 'sflag constant byte address 0x0 - dummy sync flag']
  #allocation10 [shape = 's32[]', space=sflag, size = 0x4, offset = 0, fixed_abs, tag = 'sflag constant byte address 0x0 - dummy sync flag']
  #allocation11 [shape = 's32[]', space=sflag, size = 0x4, offset = 0, fixed_abs, tag = 'sflag constant byte address 0x0 - dummy sync flag']
  #allocation12 [shape = 's32[]', space=sflag, size = 0x4, offset = 0, fixed_abs, tag = 'sflag constant byte address 0x0 - dummy sync flag']
  #allocation13 [shape = 's32[]', space=sflag, size = 0x4, offset = 0, fixed_abs, tag = 'sflag constant byte address 0x0 - dummy sync flag']
  #allocation14 [shape = 's32[]', space=sflag, size = 0x4, offset = 0, fixed_abs, tag = 'sflag constant byte address 0x0 - dummy sync flag']
  #allocation15 [shape = 's32[]', space=sflag, size = 0x4, offset = 0, fixed_abs, tag = 'sflag constant byte address 0x0 - dummy sync flag']
  #allocation16 [shape = 's32[]', space=sflag, size = 0x4, offset = 0, fixed_abs, tag = 'sflag constant byte address 0x0 - dummy sync flag']
  %s0 = inlined_call_operand.vmem [shape: s32[33], index: 0, kind: input, shape index: {}]
  %s1 = inlined_call_operand.vmem [shape: f32[32,8], index: 1, kind: input, shape index: {}]
  %s2 = inlined_call_operand.vmem [shape: s32[32,4], index: 2, kind: input, shape index: {}]
  %s3 = inlined_call_operand.vmem [shape: f32[32,8], index: 3, kind: input, shape index: {}, may-alias: {3,5}]
  %s4 = inlined_call_operand.vmem [shape: s32[32,4], index: 4, kind: input, shape index: {}, may-alias: {4,6}]
  %s5 = inlined_call_operand.vmem [shape: f32[32,8], index: 5, kind: output, shape index: {0}, may-alias: {3,5}]
  %s6 = inlined_call_operand.vmem [shape: s32[32,4], index: 6, kind: output, shape index: {1}, may-alias: {4,6}]
  %7 = xla_tuple %s5, %s6
  %s8 = sld [smem:[#allocation0]]
  $region465: #{_minkowski_pruning_impl.1} parent=0
    _
  %s10 = ssub.s32 1, %s8
  %s11 = scalar_select 0, %s10, %s8
  %s12 = sshll.u32 %s0, 4
  %s13 = int_to_ptr.vmem [resolvable:$true] %s12
  %15 = dma.vmem_to_smem %s13, 16, [#allocation6], [#allocation5]
  %16 = dma.done [#allocation5], 16
  %17 = sfence
  loop: start=0, step=1, limit=3
  $region2: #{_minkowski_pruning_impl.1} parent=0 // loop_pre_header
    _
  $region3: #{_minkowski_pruning_impl.1} parent=0 // loop_header
    %s19 = sphi 0, %s23
    %p20 = scmp.ge.s32.totalorder %s19, 3
    %s28 = sphi 0, %s30
    %s31 = sphi 0, %s28
    %s41 = sphi 0, %s31
    %s47 = sphi 0, %s49
    %s50 = sphi 0, %s47
    %s60 = sphi 0, %s50
  $region4: #{_minkowski_pruning_impl.1} parent=0 // loop_header_branch
    %22 = sbr.rel (%p20) target = $region8
  $region5: #{_minkowski_pruning_impl.1} parent=0 // loop_body
    %s24 = ssub.s32 %s19, 1
    %s25 = sadd.s32 %s19, 1
    %s26 = ssub.s32 %s19, %s25
    %p27 = scmp.eq.s32.totalorder %s26, 0
    %s29 = sadd.s32 %s28, 1
    %s30 = scalar_select %p27, %s28, %s29
    %p32 = pneg %p27
    %p33 = scmp.eq.s32.totalorder %s19, 1
    %p34 = por %p32, %p33
    %p35 = scmp.ne.s32.totalorder %s28, %s31
    %p36 = scmp.eq.s32.totalorder %s19, 0
    %p37 = por %p35, %p36
    %p38 = scmp.ne.s32.totalorder %s28, %s31
    %p39 = scmp.eq.s32.totalorder %s24, 1
    %p40 = por %p38, %p39
    %p42 = scmp.ne.s32.totalorder %s31, %s41
    %p43 = scmp.eq.s32.totalorder %s24, 0
    %p44 = por %p42, %p43
    %s45 = ssub.s32 %s19, %s25
    %p46 = scmp.eq.s32.totalorder %s45, 0
    %s48 = sadd.s32 %s47, 1
    %s49 = scalar_select %p46, %s47, %s48
    %p51 = pneg %p46
    %p52 = scmp.eq.s32.totalorder %s19, 1
    %p53 = por %p51, %p52
    %p54 = scmp.ne.s32.totalorder %s47, %s50
    %p55 = scmp.eq.s32.totalorder %s19, 0
    %p56 = por %p54, %p55
    %p57 = scmp.ne.s32.totalorder %s47, %s50
    %p58 = scmp.eq.s32.totalorder %s24, 1
    %p59 = por %p57, %p58
    %p61 = scmp.ne.s32.totalorder %s50, %s60
    %p62 = scmp.eq.s32.totalorder %s24, 0
    %p63 = por %p61, %p62
    %p64 = scmp.le.s32.totalorder 1, %s19
    // Predicated region
    $region9: #{_minkowski_pruning_impl.1} parent=5 // pred_check
      %p65 = pneg %p64
    $region10: #{_minkowski_pruning_impl.1} parent=5 // pred_check_branch
      %67 = sbr.rel (%p65) target = $region12
    $region11: #{_minkowski_pruning_impl.1} parent=5 // pred_region
      %s68 = ssub.s32 %s19, 1
    $region12: #{_minkowski_pruning_impl.1} parent=5 // pred_fallthru
      _
    %p69 = scmp.lt.s32.totalorder %s19, 2
    // Predicated region
    $region13: #{_minkowski_pruning_impl.1} parent=5 // pred_check
      %p70 = pneg %p69
    $region14: #{_minkowski_pruning_impl.1} parent=5 // pred_check_branch
      %72 = sbr.rel (%p70) target = $region16
    $region15: #{_minkowski_pruning_impl.1} parent=5 // pred_region
      // Predicated region
      $region17: #{_minkowski_pruning_impl.1} parent=15 // pred_check
        %p73 = pneg %p37
      $region18: #{_minkowski_pruning_impl.1} parent=15 // pred_check_branch
        %75 = sbr.rel (%p73) target = $region20
      $region19: #{_minkowski_pruning_impl.1} parent=15 // pred_region
        %s76 = smul.u32 2, %s19
        %p77 = scmp.lt.s32.totalorder %s76, 3
        %s78 = scalar_select %p77, %s76, 3
        %s79 = smul.addr %s78, 8
        %s80 = scalar_lea.vmem %s1, %s79
        %s81 = smul.u32 2, %s19
      $region20: #{_minkowski_pruning_impl.1} parent=15 // pred_fallthru
        _
      // Predicated region
      $region21: #{_minkowski_pruning_impl.1} parent=15 // pred_check
        %p82 = pneg %p56
      $region22: #{_minkowski_pruning_impl.1} parent=15 // pred_check_branch
        %84 = sbr.rel (%p82) target = $region24
      $region23: #{_minkowski_pruning_impl.1} parent=15 // pred_region
        %s85 = smul.u32 2, %s19
        %p86 = scmp.lt.s32.totalorder %s85, 3
        %s87 = scalar_select %p86, %s85, 3
        %s88 = smul.addr %s87, 8
        %s89 = scalar_lea.vmem %s2, %s88
        %s90 = smul.u32 2, %s19
      $region24: #{_minkowski_pruning_impl.1} parent=15 // pred_fallthru
        _
    $region16: #{_minkowski_pruning_impl.1} parent=5 // pred_fallthru
      _
    %p91 = scmp.le.s32.totalorder 1, %s19
    // Predicated region
    $region25: #{_minkowski_pruning_impl.1} parent=5 // pred_check
      %p92 = pneg %p91
    $region26: #{_minkowski_pruning_impl.1} parent=5 // pred_check_branch
      %94 = sbr.rel (%p92) target = $region28
    $region27: #{_minkowski_pruning_impl.1} parent=5 // pred_region
      %s95 = ssub.s32 %s19, 1
      %s96 = smul.u32 2, %s24
      %p97 = scmp.lt.s32.totalorder %s96, 3
      %s98 = scalar_select %p97, %s96, 3
      %s99 = smul.addr %s98, 8
      %s100 = scalar_lea.vmem %s1, %s99
      %p101 = pneg %p44
      %p102 = pneg %p40
      %s103 = smul.u32 2, %s24
      %p104 = scmp.lt.s32.totalorder %s103, 3
      %s105 = scalar_select %p104, %s103, 3
      %s106 = smul.addr %s105, 8
      %s107 = scalar_lea.vmem %s2, %s106
      %p108 = pneg %p63
      %p109 = pneg %p59
      %s110 = smul.u32 2, %s24
      %p111 = scmp.lt.s32.totalorder %s110, 3
      %s112 = scalar_select %p111, %s110, 3
      %s113 = smul.addr %s112, 8
      %s114 = scalar_lea.vmem %s1, %s113
      %s115 = smul.u32 2, %s24
      %s116 = smul.u32 2, %s24
      %p117 = scmp.lt.s32.totalorder %s116, 3
      %s118 = scalar_select %p117, %s116, 3
      %s119 = smul.addr %s118, 8
      %s120 = scalar_lea.vmem %s2, %s119
      %s121 = smul.u32 2, %s24
      %s122 = smul.u32 %s24, 16
      %s123 = sld [smem:[#allocation6 + %s122]]
      %s124 = sadd.s32 %s122, 16
      %s125 = sld [smem:[#allocation6 + %s124]]
      %s126 = ssub.s32 %s125, %s123
      %s127 = sadd.s32 %s122, 8
      %s128 = sld [smem:[#allocation6 + %s127]]
      %s129 = ssub.s32 %s128, %s123
      %p130 = scmp.eq.s32.totalorder %s129, 8
      // Predicated region
      $region29: #{_minkowski_pruning_impl.1} parent=27 // pred_check
        %p131 = pneg %p130
      $region30: #{_minkowski_pruning_impl.1} parent=27 // pred_check_branch
        %133 = sbr.rel (%p131) target = $region32
      $region31: #{_minkowski_pruning_impl.1} parent=27 // pred_region
        %v134 = vld [vmem:[%s114] sm:$0xff]
        %vm135 = vcmask 64512
        %136 = vst.msk [vmem:[#allocation2] sm:$0xff] %vm135, %v134
        %v137 = vld [vmem:[%s120] sm:$0xff]
        %vm138 = vcmask 31744
        %139 = vst.msk [vmem:[#allocation3] sm:$0xff] %vm138, %v137
      $region32: #{_minkowski_pruning_impl.1} parent=27 // pred_fallthru
        _
      %p140 = scmp.gt.s32.totalorder %s129, 0
      %p141 = scmp.lt.s32.totalorder %s129, 8
      %p142 = pnand %p140, %p141
      %p143 = pneg %p142
      // Predicated region
      $region33: #{_minkowski_pruning_impl.1} parent=27 // pred_check
        _
      $region34: #{_minkowski_pruning_impl.1} parent=27 // pred_check_branch
        %145 = sbr.rel (%p142) target = $region36
      $region35: #{_minkowski_pruning_impl.1} parent=27 // pred_region
        %s146 = sld [smem:[#allocation6 + %s122]]
        %s147 = sadd.s32 %s122, 1
        %s148 = sld [smem:[#allocation6 + %s147]]
        %s149 = ssub.s32 %s148, %s146
        %p150 = scmp.gt.s32.totalorder %s149, 0
        // Predicated region
        $region37: #{_minkowski_pruning_impl.1} parent=35 // pred_check
          %p151 = pneg %p150
        $region38: #{_minkowski_pruning_impl.1} parent=35 // pred_check_branch
          %153 = sbr.rel (%p151) target = $region40
        $region39: #{_minkowski_pruning_impl.1} parent=35 // pred_region
          %s154 = ssub.s32 %s146, %s123
          %v155 = vld [vmem:[%s114] sm:$0x1]
          %s156 = scalar_lea.vmem [#allocation2], %s154
          %vm157 = vcmask 57344
          %158 = vst.msk [vmem:[%s156] sm:$0x1] %vm157, %v155
          %v159 = vld [vmem:[%s120] sm:$0x1]
          %s160 = scalar_lea.vmem [#allocation3], %s154
          %vm161 = vcmask 24576
          %162 = vst.msk [vmem:[%s160] sm:$0x1] %vm161, %v159
        $region40: #{_minkowski_pruning_impl.1} parent=35 // pred_fallthru
          _
        %s163 = sld [smem:[#allocation6 + %s147]]
        %s164 = sadd.s32 %s122, 2
        %s165 = sld [smem:[#allocation6 + %s164]]
        %s166 = ssub.s32 %s165, %s163
        %p167 = scmp.gt.s32.totalorder %s166, 0
        // Predicated region
        $region41: #{_minkowski_pruning_impl.1} parent=35 // pred_check
          %p168 = pneg %p167
        $region42: #{_minkowski_pruning_impl.1} parent=35 // pred_check_branch
          %170 = sbr.rel (%p168) target = $region44
        $region43: #{_minkowski_pruning_impl.1} parent=35 // pred_region
          %s171 = ssub.s32 %s163, %s123
          %s172 = sadd.s32 0, 1
          %s173 = scalar_lea.vmem %s114, %s172
          %v174 = vld [vmem:[%s173] sm:$0x1]
          %s175 = scalar_lea.vmem [#allocation2], %s171
          %vm176 = vcmask 57344
          %177 = vst.msk [vmem:[%s175] sm:$0x1] %vm176, %v174
          %s178 = scalar_lea.vmem %s120, %s172
          %v179 = vld [vmem:[%s178] sm:$0x1]
          %s180 = scalar_lea.vmem [#allocation3], %s171
          %vm181 = vcmask 24576
          %182 = vst.msk [vmem:[%s180] sm:$0x1] %vm181, %v179
        $region44: #{_minkowski_pruning_impl.1} parent=35 // pred_fallthru
          _
        %s183 = sld [smem:[#allocation6 + %s164]]
        %s184 = sadd.s32 %s122, 3
        %s185 = sld [smem:[#allocation6 + %s184]]
        %s186 = ssub.s32 %s185, %s183
        %p187 = scmp.gt.s32.totalorder %s186, 0
        // Predicated region
        $region45: #{_minkowski_pruning_impl.1} parent=35 // pred_check
          %p188 = pneg %p187
        $region46: #{_minkowski_pruning_impl.1} parent=35 // pred_check_branch
          %190 = sbr.rel (%p188) target = $region48
        $region47: #{_minkowski_pruning_impl.1} parent=35 // pred_region
          %s191 = ssub.s32 %s183, %s123
          %s192 = sadd.s32 0, 2
          %s193 = scalar_lea.vmem %s114, %s192
          %v194 = vld [vmem:[%s193] sm:$0x1]
          %s195 = scalar_lea.vmem [#allocation2], %s191
          %vm196 = vcmask 57344
          %197 = vst.msk [vmem:[%s195] sm:$0x1] %vm196, %v194
          %s198 = scalar_lea.vmem %s120, %s192
          %v199 = vld [vmem:[%s198] sm:$0x1]
          %s200 = scalar_lea.vmem [#allocation3], %s191
          %vm201 = vcmask 24576
          %202 = vst.msk [vmem:[%s200] sm:$0x1] %vm201, %v199
        $region48: #{_minkowski_pruning_impl.1} parent=35 // pred_fallthru
          _
        %s203 = sld [smem:[#allocation6 + %s184]]
        %s204 = sadd.s32 %s122, 4
        %s205 = sld [smem:[#allocation6 + %s204]]
        %s206 = ssub.s32 %s205, %s203
        %p207 = scmp.gt.s32.totalorder %s206, 0
        // Predicated region
        $region49: #{_minkowski_pruning_impl.1} parent=35 // pred_check
          %p208 = pneg %p207
        $region50: #{_minkowski_pruning_impl.1} parent=35 // pred_check_branch
          %210 = sbr.rel (%p208) target = $region52
        $region51: #{_minkowski_pruning_impl.1} parent=35 // pred_region
          %s211 = ssub.s32 %s203, %s123
          %s212 = sadd.s32 0, 3
          %s213 = scalar_lea.vmem %s114, %s212
          %v214 = vld [vmem:[%s213] sm:$0x1]
          %s215 = scalar_lea.vmem [#allocation2], %s211
          %vm216 = vcmask 57344
          %217 = vst.msk [vmem:[%s215] sm:$0x1] %vm216, %v214
          %s218 = scalar_lea.vmem %s120, %s212
          %v219 = vld [vmem:[%s218] sm:$0x1]
          %s220 = scalar_lea.vmem [#allocation3], %s211
          %vm221 = vcmask 24576
          %222 = vst.msk [vmem:[%s220] sm:$0x1] %vm221, %v219
        $region52: #{_minkowski_pruning_impl.1} parent=35 // pred_fallthru
          _
        %s223 = sld [smem:[#allocation6 + %s204]]
        %s224 = sadd.s32 %s122, 5
        %s225 = sld [smem:[#allocation6 + %s224]]
        %s226 = ssub.s32 %s225, %s223
        %p227 = scmp.gt.s32.totalorder %s226, 0
        // Predicated region
        $region53: #{_minkowski_pruning_impl.1} parent=35 // pred_check
          %p228 = pneg %p227
        $region54: #{_minkowski_pruning_impl.1} parent=35 // pred_check_branch
          %230 = sbr.rel (%p228) target = $region56
        $region55: #{_minkowski_pruning_impl.1} parent=35 // pred_region
          %s231 = ssub.s32 %s223, %s123
          %s232 = sadd.s32 0, 4
          %s233 = scalar_lea.vmem %s114, %s232
          %v234 = vld [vmem:[%s233] sm:$0x1]
          %s235 = scalar_lea.vmem [#allocation2], %s231
          %vm236 = vcmask 57344
          %237 = vst.msk [vmem:[%s235] sm:$0x1] %vm236, %v234
          %s238 = scalar_lea.vmem %s120, %s232
          %v239 = vld [vmem:[%s238] sm:$0x1]
          %s240 = scalar_lea.vmem [#allocation3], %s231
          %vm241 = vcmask 24576
          %242 = vst.msk [vmem:[%s240] sm:$0x1] %vm241, %v239
        $region56: #{_minkowski_pruning_impl.1} parent=35 // pred_fallthru
          _
        %s243 = sld [smem:[#allocation6 + %s224]]
        %s244 = sadd.s32 %s122, 6
        %s245 = sld [smem:[#allocation6 + %s244]]
        %s246 = ssub.s32 %s245, %s243
        %p247 = scmp.gt.s32.totalorder %s246, 0
        // Predicated region
        $region57: #{_minkowski_pruning_impl.1} parent=35 // pred_check
          %p248 = pneg %p247
        $region58: #{_minkowski_pruning_impl.1} parent=35 // pred_check_branch
          %250 = sbr.rel (%p248) target = $region60
        $region59: #{_minkowski_pruning_impl.1} parent=35 // pred_region
          %s251 = ssub.s32 %s243, %s123
          %s252 = sadd.s32 0, 5
          %s253 = scalar_lea.vmem %s114, %s252
          %v254 = vld [vmem:[%s253] sm:$0x1]
          %s255 = scalar_lea.vmem [#allocation2], %s251
          %vm256 = vcmask 57344
          %257 = vst.msk [vmem:[%s255] sm:$0x1] %vm256, %v254
          %s258 = scalar_lea.vmem %s120, %s252
          %v259 = vld [vmem:[%s258] sm:$0x1]
          %s260 = scalar_lea.vmem [#allocation3], %s251
          %vm261 = vcmask 24576
          %262 = vst.msk [vmem:[%s260] sm:$0x1] %vm261, %v259
        $region60: #{_minkowski_pruning_impl.1} parent=35 // pred_fallthru
          _
        %s263 = sld [smem:[#allocation6 + %s244]]
        %s264 = sadd.s32 %s122, 7
        %s265 = sld [smem:[#allocation6 + %s264]]
        %s266 = ssub.s32 %s265, %s263
        %p267 = scmp.gt.s32.totalorder %s266, 0
        // Predicated region
        $region61: #{_minkowski_pruning_impl.1} parent=35 // pred_check
          %p268 = pneg %p267
        $region62: #{_minkowski_pruning_impl.1} parent=35 // pred_check_branch
          %270 = sbr.rel (%p268) target = $region64
        $region63: #{_minkowski_pruning_impl.1} parent=35 // pred_region
          %s271 = ssub.s32 %s263, %s123
          %s272 = sadd.s32 0, 6
          %s273 = scalar_lea.vmem %s114, %s272
          %v274 = vld [vmem:[%s273] sm:$0x1]
          %s275 = scalar_lea.vmem [#allocation2], %s271
          %vm276 = vcmask 57344
          %277 = vst.msk [vmem:[%s275] sm:$0x1] %vm276, %v274
          %s278 = scalar_lea.vmem %s120, %s272
          %v279 = vld [vmem:[%s278] sm:$0x1]
          %s280 = scalar_lea.vmem [#allocation3], %s271
          %vm281 = vcmask 24576
          %282 = vst.msk [vmem:[%s280] sm:$0x1] %vm281, %v279
        $region64: #{_minkowski_pruning_impl.1} parent=35 // pred_fallthru
          _
        %s283 = sld [smem:[#allocation6 + %s264]]
        %s284 = sld [smem:[#allocation6 + %s127]]
        %s285 = ssub.s32 %s284, %s283
        %p286 = scmp.gt.s32.totalorder %s285, 0
        // Predicated region
        $region65: #{_minkowski_pruning_impl.1} parent=35 // pred_check
          %p287 = pneg %p286
        $region66: #{_minkowski_pruning_impl.1} parent=35 // pred_check_branch
          %289 = sbr.rel (%p287) target = $region68
        $region67: #{_minkowski_pruning_impl.1} parent=35 // pred_region
          %s290 = ssub.s32 %s283, %s123
          %s291 = sadd.s32 0, 7
          %s292 = scalar_lea.vmem %s114, %s291
          %v293 = vld [vmem:[%s292] sm:$0x1]
          %s294 = scalar_lea.vmem [#allocation2], %s290
          %vm295 = vcmask 57344
          %296 = vst.msk [vmem:[%s294] sm:$0x1] %vm295, %v293
          %s297 = scalar_lea.vmem %s120, %s291
          %v298 = vld [vmem:[%s297] sm:$0x1]
          %s299 = scalar_lea.vmem [#allocation3], %s290
          %vm300 = vcmask 24576
          %301 = vst.msk [vmem:[%s299] sm:$0x1] %vm300, %v298
        $region68: #{_minkowski_pruning_impl.1} parent=35 // pred_fallthru
          _
      $region36: #{_minkowski_pruning_impl.1} parent=27 // pred_fallthru
        _
      %s302 = sld [smem:[#allocation6 + %s127]]
      %s303 = sld [smem:[#allocation6 + %s124]]
      %s304 = ssub.s32 %s303, %s302
      %s305 = ssub.s32 %s302, %s123
      %p306 = scmp.eq.s32.totalorder %s304, 8
      // Predicated region
      $region69: #{_minkowski_pruning_impl.1} parent=27 // pred_check
        %p307 = pneg %p306
      $region70: #{_minkowski_pruning_impl.1} parent=27 // pred_check_branch
        %309 = sbr.rel (%p307) target = $region72
      $region71: #{_minkowski_pruning_impl.1} parent=27 // pred_region
        %s310 = scalar_lea.vmem %s114, 8
        %v311 = vld [vmem:[%s310] sm:$0xff]
        %s312 = scalar_lea.vmem [#allocation2], %s305
        %vm313 = vcmask 64512
        %314 = vst.msk [vmem:[%s312] sm:$0xff] %vm313, %v311
        %s315 = scalar_lea.vmem %s120, 8
        %v316 = vld [vmem:[%s315] sm:$0xff]
        %s317 = scalar_lea.vmem [#allocation3], %s305
        %vm318 = vcmask 31744
        %319 = vst.msk [vmem:[%s317] sm:$0xff] %vm318, %v316
      $region72: #{_minkowski_pruning_impl.1} parent=27 // pred_fallthru
        _
      %p320 = scmp.gt.s32.totalorder %s304, 0
      %p321 = scmp.lt.s32.totalorder %s304, 8
      %p322 = pnand %p320, %p321
      %p323 = pneg %p322
      // Predicated region
      $region73: #{_minkowski_pruning_impl.1} parent=27 // pred_check
        _
      $region74: #{_minkowski_pruning_impl.1} parent=27 // pred_check_branch
        %325 = sbr.rel (%p322) target = $region76
      $region75: #{_minkowski_pruning_impl.1} parent=27 // pred_region
        %s326 = sld [smem:[#allocation6 + %s127]]
        %s327 = sadd.s32 %s122, 9
        %s328 = sld [smem:[#allocation6 + %s327]]
        %s329 = ssub.s32 %s328, %s326
        %p330 = scmp.gt.s32.totalorder %s329, 0
        // Predicated region
        $region77: #{_minkowski_pruning_impl.1} parent=75 // pred_check
          %p331 = pneg %p330
        $region78: #{_minkowski_pruning_impl.1} parent=75 // pred_check_branch
          %333 = sbr.rel (%p331) target = $region80
        $region79: #{_minkowski_pruning_impl.1} parent=75 // pred_region
          %s334 = ssub.s32 %s326, %s123
          %s335 = scalar_lea.vmem %s114, 8
          %v336 = vld [vmem:[%s335] sm:$0x1]
          %s337 = scalar_lea.vmem [#allocation2], %s334
          %vm338 = vcmask 57344
          %339 = vst.msk [vmem:[%s337] sm:$0x1] %vm338, %v336
          %s340 = scalar_lea.vmem %s120, 8
          %v341 = vld [vmem:[%s340] sm:$0x1]
          %s342 = scalar_lea.vmem [#allocation3], %s334
          %vm343 = vcmask 24576
          %344 = vst.msk [vmem:[%s342] sm:$0x1] %vm343, %v341
        $region80: #{_minkowski_pruning_impl.1} parent=75 // pred_fallthru
          _
        %s345 = sld [smem:[#allocation6 + %s327]]
        %s346 = sadd.s32 %s122, 10
        %s347 = sld [smem:[#allocation6 + %s346]]
        %s348 = ssub.s32 %s347, %s345
        %p349 = scmp.gt.s32.totalorder %s348, 0
        // Predicated region
        $region81: #{_minkowski_pruning_impl.1} parent=75 // pred_check
          %p350 = pneg %p349
        $region82: #{_minkowski_pruning_impl.1} parent=75 // pred_check_branch
          %352 = sbr.rel (%p350) target = $region84
        $region83: #{_minkowski_pruning_impl.1} parent=75 // pred_region
          %s353 = ssub.s32 %s345, %s123
          %s354 = sadd.s32 8, 1
          %s355 = scalar_lea.vmem %s114, %s354
          %v356 = vld [vmem:[%s355] sm:$0x1]
          %s357 = scalar_lea.vmem [#allocation2], %s353
          %vm358 = vcmask 57344
          %359 = vst.msk [vmem:[%s357] sm:$0x1] %vm358, %v356
          %s360 = scalar_lea.vmem %s120, %s354
          %v361 = vld [vmem:[%s360] sm:$0x1]
          %s362 = scalar_lea.vmem [#allocation3], %s353
          %vm363 = vcmask 24576
          %364 = vst.msk [vmem:[%s362] sm:$0x1] %vm363, %v361
        $region84: #{_minkowski_pruning_impl.1} parent=75 // pred_fallthru
          _
        %s365 = sld [smem:[#allocation6 + %s346]]
        %s366 = sadd.s32 %s122, 11
        %s367 = sld [smem:[#allocation6 + %s366]]
        %s368 = ssub.s32 %s367, %s365
        %p369 = scmp.gt.s32.totalorder %s368, 0
        // Predicated region
        $region85: #{_minkowski_pruning_impl.1} parent=75 // pred_check
          %p370 = pneg %p369
        $region86: #{_minkowski_pruning_impl.1} parent=75 // pred_check_branch
          %372 = sbr.rel (%p370) target = $region88
        $region87: #{_minkowski_pruning_impl.1} parent=75 // pred_region
          %s373 = ssub.s32 %s365, %s123
          %s374 = sadd.s32 8, 2
          %s375 = scalar_lea.vmem %s114, %s374
          %v376 = vld [vmem:[%s375] sm:$0x1]
          %s377 = scalar_lea.vmem [#allocation2], %s373
          %vm378 = vcmask 57344
          %379 = vst.msk [vmem:[%s377] sm:$0x1] %vm378, %v376
          %s380 = scalar_lea.vmem %s120, %s374
          %v381 = vld [vmem:[%s380] sm:$0x1]
          %s382 = scalar_lea.vmem [#allocation3], %s373
          %vm383 = vcmask 24576
          %384 = vst.msk [vmem:[%s382] sm:$0x1] %vm383, %v381
        $region88: #{_minkowski_pruning_impl.1} parent=75 // pred_fallthru
          _
        %s385 = sld [smem:[#allocation6 + %s366]]
        %s386 = sadd.s32 %s122, 12
        %s387 = sld [smem:[#allocation6 + %s386]]
        %s388 = ssub.s32 %s387, %s385
        %p389 = scmp.gt.s32.totalorder %s388, 0
        // Predicated region
        $region89: #{_minkowski_pruning_impl.1} parent=75 // pred_check
          %p390 = pneg %p389
        $region90: #{_minkowski_pruning_impl.1} parent=75 // pred_check_branch
          %392 = sbr.rel (%p390) target = $region92
        $region91: #{_minkowski_pruning_impl.1} parent=75 // pred_region
          %s393 = ssub.s32 %s385, %s123
          %s394 = sadd.s32 8, 3
          %s395 = scalar_lea.vmem %s114, %s394
          %v396 = vld [vmem:[%s395] sm:$0x1]
          %s397 = scalar_lea.vmem [#allocation2], %s393
          %vm398 = vcmask 57344
          %399 = vst.msk [vmem:[%s397] sm:$0x1] %vm398, %v396
          %s400 = scalar_lea.vmem %s120, %s394
          %v401 = vld [vmem:[%s400] sm:$0x1]
          %s402 = scalar_lea.vmem [#allocation3], %s393
          %vm403 = vcmask 24576
          %404 = vst.msk [vmem:[%s402] sm:$0x1] %vm403, %v401
        $region92: #{_minkowski_pruning_impl.1} parent=75 // pred_fallthru
          _
        %s405 = sld [smem:[#allocation6 + %s386]]
        %s406 = sadd.s32 %s122, 13
        %s407 = sld [smem:[#allocation6 + %s406]]
        %s408 = ssub.s32 %s407, %s405
        %p409 = scmp.gt.s32.totalorder %s408, 0
        // Predicated region
        $region93: #{_minkowski_pruning_impl.1} parent=75 // pred_check
          %p410 = pneg %p409
        $region94: #{_minkowski_pruning_impl.1} parent=75 // pred_check_branch
          %412 = sbr.rel (%p410) target = $region96
        $region95: #{_minkowski_pruning_impl.1} parent=75 // pred_region
          %s413 = ssub.s32 %s405, %s123
          %s414 = sadd.s32 8, 4
          %s415 = scalar_lea.vmem %s114, %s414
          %v416 = vld [vmem:[%s415] sm:$0x1]
          %s417 = scalar_lea.vmem [#allocation2], %s413
          %vm418 = vcmask 57344
          %419 = vst.msk [vmem:[%s417] sm:$0x1] %vm418, %v416
          %s420 = scalar_lea.vmem %s120, %s414
          %v421 = vld [vmem:[%s420] sm:$0x1]
          %s422 = scalar_lea.vmem [#allocation3], %s413
          %vm423 = vcmask 24576
          %424 = vst.msk [vmem:[%s422] sm:$0x1] %vm423, %v421
        $region96: #{_minkowski_pruning_impl.1} parent=75 // pred_fallthru
          _
        %s425 = sld [smem:[#allocation6 + %s406]]
        %s426 = sadd.s32 %s122, 14
        %s427 = sld [smem:[#allocation6 + %s426]]
        %s428 = ssub.s32 %s427, %s425
        %p429 = scmp.gt.s32.totalorder %s428, 0
        // Predicated region
        $region97: #{_minkowski_pruning_impl.1} parent=75 // pred_check
          %p430 = pneg %p429
        $region98: #{_minkowski_pruning_impl.1} parent=75 // pred_check_branch
          %432 = sbr.rel (%p430) target = $region100
        $region99: #{_minkowski_pruning_impl.1} parent=75 // pred_region
          %s433 = ssub.s32 %s425, %s123
          %s434 = sadd.s32 8, 5
          %s435 = scalar_lea.vmem %s114, %s434
          %v436 = vld [vmem:[%s435] sm:$0x1]
          %s437 = scalar_lea.vmem [#allocation2], %s433
          %vm438 = vcmask 57344
          %439 = vst.msk [vmem:[%s437] sm:$0x1] %vm438, %v436
          %s440 = scalar_lea.vmem %s120, %s434
          %v441 = vld [vmem:[%s440] sm:$0x1]
          %s442 = scalar_lea.vmem [#allocation3], %s433
          %vm443 = vcmask 24576
          %444 = vst.msk [vmem:[%s442] sm:$0x1] %vm443, %v441
        $region100: #{_minkowski_pruning_impl.1} parent=75 // pred_fallthru
          _
        %s445 = sld [smem:[#allocation6 + %s426]]
        %s446 = sadd.s32 %s122, 15
        %s447 = sld [smem:[#allocation6 + %s446]]
        %s448 = ssub.s32 %s447, %s445
        %p449 = scmp.gt.s32.totalorder %s448, 0
        // Predicated region
        $region101: #{_minkowski_pruning_impl.1} parent=75 // pred_check
          %p450 = pneg %p449
        $region102: #{_minkowski_pruning_impl.1} parent=75 // pred_check_branch
          %452 = sbr.rel (%p450) target = $region104
        $region103: #{_minkowski_pruning_impl.1} parent=75 // pred_region
          %s453 = ssub.s32 %s445, %s123
          %s454 = sadd.s32 8, 6
          %s455 = scalar_lea.vmem %s114, %s454
          %v456 = vld [vmem:[%s455] sm:$0x1]
          %s457 = scalar_lea.vmem [#allocation2], %s453
          %vm458 = vcmask 57344
          %459 = vst.msk [vmem:[%s457] sm:$0x1] %vm458, %v456
          %s460 = scalar_lea.vmem %s120, %s454
          %v461 = vld [vmem:[%s460] sm:$0x1]
          %s462 = scalar_lea.vmem [#allocation3], %s453
          %vm463 = vcmask 24576
          %464 = vst.msk [vmem:[%s462] sm:$0x1] %vm463, %v461
        $region104: #{_minkowski_pruning_impl.1} parent=75 // pred_fallthru
          _
        %s465 = sld [smem:[#allocation6 + %s446]]
        %s466 = sld [smem:[#allocation6 + %s124]]
        %s467 = ssub.s32 %s466, %s465
        %p468 = scmp.gt.s32.totalorder %s467, 0
        // Predicated region
        $region105: #{_minkowski_pruning_impl.1} parent=75 // pred_check
          %p469 = pneg %p468
        $region106: #{_minkowski_pruning_impl.1} parent=75 // pred_check_branch
          %471 = sbr.rel (%p469) target = $region108
        $region107: #{_minkowski_pruning_impl.1} parent=75 // pred_region
          %s472 = ssub.s32 %s465, %s123
          %s473 = sadd.s32 8, 7
          %s474 = scalar_lea.vmem %s114, %s473
          %v475 = vld [vmem:[%s474] sm:$0x1]
          %s476 = scalar_lea.vmem [#allocation2], %s472
          %vm477 = vcmask 57344
          %478 = vst.msk [vmem:[%s476] sm:$0x1] %vm477, %v475
          %s479 = scalar_lea.vmem %s120, %s473
          %v480 = vld [vmem:[%s479] sm:$0x1]
          %s481 = scalar_lea.vmem [#allocation3], %s472
          %vm482 = vcmask 24576
          %483 = vst.msk [vmem:[%s481] sm:$0x1] %vm482, %v480
        $region108: #{_minkowski_pruning_impl.1} parent=75 // pred_fallthru
          _
      $region76: #{_minkowski_pruning_impl.1} parent=27 // pred_fallthru
        _
      %s484 = sand.u32 %s126, 16
      %p485 = scmp.gt.s32.totalorder %s484, 0
      // Predicated region
      $region109: #{_minkowski_pruning_impl.1} parent=27 // pred_check
        %p486 = pneg %p485
      $region110: #{_minkowski_pruning_impl.1} parent=27 // pred_check_branch
        %488 = sbr.rel (%p486) target = $region112
      $region111: #{_minkowski_pruning_impl.1} parent=27 // pred_region
        %s489 = scalar_lea.vmem %s5, %s123
        %p491 = scmp.lt.u32.totalorder 16, 8
        %p492 = pneg %p491
        // Predicated region
        $region113: #{_minkowski_pruning_impl.1} parent=111 // pred_check
          _
        $region114: #{_minkowski_pruning_impl.1} parent=111 // pred_check_branch
          %494 = sbr.rel (%p491) target = $region116
        $region115: #{_minkowski_pruning_impl.1} parent=111 // pred_region
          %s510 = sand.u32 16, 7
          %p511 = scmp.eq.s32.totalorder %s510, 0
          // Predicated region
          $region128: #{_minkowski_pruning_impl.1} parent=115 // pred_check
            %p512 = pneg %p511
          $region129: #{_minkowski_pruning_impl.1} parent=115 // pred_check_branch
            %514 = sbr.rel (%p512) target = $region131
          $region130: #{_minkowski_pruning_impl.1} parent=115 // pred_region
            loop: start=0, step=1, limit=1
            $region132: #{_minkowski_pruning_impl.1} parent=130 // loop_pre_header
              _
            $region133: #{_minkowski_pruning_impl.1} parent=130 // loop_header
              %s516 = sphi 0, %s520
              %p517 = scmp.ge.s32.totalorder %s516, 1
              %s521 = sphi [#allocation2], [#allocation2]
              %s522 = sphi %s489, %s489
            $region134: #{_minkowski_pruning_impl.1} parent=130 // loop_header_branch
              %519 = sbr.rel (%p517) target = $region138
            $region135: #{_minkowski_pruning_impl.1} parent=130 // loop_body
              %v523 = vld [vmem:[%s521] sm:$0xff]
              %524 = vst [vmem:[%s522] sm:$0xff] %v523
              %v525 = vld [vmem:[%s521 + $0x8] sm:$0xff]
              %526 = vst [vmem:[%s522 + $0x8] sm:$0xff] %v525
            $region136: #{_minkowski_pruning_impl.1} parent=130 // loop_footer
              %s520 = sadd.s32 1, %s516
            $region137: #{_minkowski_pruning_impl.1} parent=130 // loop_footer_branch
              %515 = sbr.rel target = $region133
            $region138: #{_minkowski_pruning_impl.1} parent=130 // loop_exit
              _
          $region131: #{_minkowski_pruning_impl.1} parent=115 // pred_fallthru
            _
          %p527 = pneg %p511
          // Predicated region
          $region139: #{_minkowski_pruning_impl.1} parent=115 // pred_check
            _
          $region140: #{_minkowski_pruning_impl.1} parent=115 // pred_check_branch
            %529 = sbr.rel (%p511) target = $region142
          $region141: #{_minkowski_pruning_impl.1} parent=115 // pred_region
            %s530 = sand.u32 16, 7
          $region142: #{_minkowski_pruning_impl.1} parent=115 // pred_fallthru
            _
        $region116: #{_minkowski_pruning_impl.1} parent=111 // pred_fallthru
          _
        // Predicated region
        $region117: #{_minkowski_pruning_impl.1} parent=111 // pred_check
          %p495 = pneg %p491
        $region118: #{_minkowski_pruning_impl.1} parent=111 // pred_check_branch
          %497 = sbr.rel (%p495) target = $region120
        $region119: #{_minkowski_pruning_impl.1} parent=111 // pred_region
          %s498 = sshll.u32 1, 16
          %s499 = ssub.s32 %s498, 1
          loop: start=0, step=1, limit=1
          $region121: #{_minkowski_pruning_impl.1} parent=119 // loop_pre_header
            _
          $region122: #{_minkowski_pruning_impl.1} parent=119 // loop_header
            %s501 = sphi 0, %s505
            %p502 = scmp.ge.s32.totalorder %s501, 1
            %s506 = sphi [#allocation2], [#allocation2]
            %s507 = sphi %s489, %s489
          $region123: #{_minkowski_pruning_impl.1} parent=119 // loop_header_branch
            %504 = sbr.rel (%p502) target = $region127
          $region124: #{_minkowski_pruning_impl.1} parent=119 // loop_body
            %v508 = vld [vmem:[%s506] sm:%s499]
            %509 = vst [vmem:[%s507] sm:%s499] %v508
          $region125: #{_minkowski_pruning_impl.1} parent=119 // loop_footer
            %s505 = sadd.s32 1, %s501
          $region126: #{_minkowski_pruning_impl.1} parent=119 // loop_footer_branch
            %500 = sbr.rel target = $region122
          $region127: #{_minkowski_pruning_impl.1} parent=119 // loop_exit
            _
        $region120: #{_minkowski_pruning_impl.1} parent=111 // pred_fallthru
          _
        // Predicated region
        $region143: #{_minkowski_pruning_impl.1} parent=111 // pred_check
          _
        $region144: #{_minkowski_pruning_impl.1} parent=111 // pred_check_branch
          %533 = sbr.rel (0) target = $region146
        $region145: #{_minkowski_pruning_impl.1} parent=111 // pred_region
          %534 = vsyncadd [#allocation4], 256
        $region146: #{_minkowski_pruning_impl.1} parent=111 // pred_fallthru
          _
        %s535 = scalar_lea.vmem %s6, %s123
        %s536 = scalar_lea.sflag [#allocation4], 1
        %p538 = scmp.lt.u32.totalorder 16, 8
        %p539 = pneg %p538
        // Predicated region
        $region147: #{_minkowski_pruning_impl.1} parent=111 // pred_check
          _
        $region148: #{_minkowski_pruning_impl.1} parent=111 // pred_check_branch
          %541 = sbr.rel (%p538) target = $region150
        $region149: #{_minkowski_pruning_impl.1} parent=111 // pred_region
          %s557 = sand.u32 16, 7
          %p558 = scmp.eq.s32.totalorder %s557, 0
          // Predicated region
          $region162: #{_minkowski_pruning_impl.1} parent=149 // pred_check
            %p559 = pneg %p558
          $region163: #{_minkowski_pruning_impl.1} parent=149 // pred_check_branch
            %561 = sbr.rel (%p559) target = $region165
          $region164: #{_minkowski_pruning_impl.1} parent=149 // pred_region
            loop: start=0, step=1, limit=1
            $region166: #{_minkowski_pruning_impl.1} parent=164 // loop_pre_header
              _
            $region167: #{_minkowski_pruning_impl.1} parent=164 // loop_header
              %s563 = sphi 0, %s567
              %p564 = scmp.ge.s32.totalorder %s563, 1
              %s568 = sphi [#allocation3], [#allocation3]
              %s569 = sphi %s535, %s535
            $region168: #{_minkowski_pruning_impl.1} parent=164 // loop_header_branch
              %566 = sbr.rel (%p564) target = $region172
            $region169: #{_minkowski_pruning_impl.1} parent=164 // loop_body
              %v570 = vld [vmem:[%s568] sm:$0xff]
              %571 = vst [vmem:[%s569] sm:$0xff] %v570
              %v572 = vld [vmem:[%s568 + $0x8] sm:$0xff]
              %573 = vst [vmem:[%s569 + $0x8] sm:$0xff] %v572
            $region170: #{_minkowski_pruning_impl.1} parent=164 // loop_footer
              %s567 = sadd.s32 1, %s563
            $region171: #{_minkowski_pruning_impl.1} parent=164 // loop_footer_branch
              %562 = sbr.rel target = $region167
            $region172: #{_minkowski_pruning_impl.1} parent=164 // loop_exit
              _
          $region165: #{_minkowski_pruning_impl.1} parent=149 // pred_fallthru
            _
          %p574 = pneg %p558
          // Predicated region
          $region173: #{_minkowski_pruning_impl.1} parent=149 // pred_check
            _
          $region174: #{_minkowski_pruning_impl.1} parent=149 // pred_check_branch
            %576 = sbr.rel (%p558) target = $region176
          $region175: #{_minkowski_pruning_impl.1} parent=149 // pred_region
            %s577 = sand.u32 16, 7
          $region176: #{_minkowski_pruning_impl.1} parent=149 // pred_fallthru
            _
        $region150: #{_minkowski_pruning_impl.1} parent=111 // pred_fallthru
          _
        // Predicated region
        $region151: #{_minkowski_pruning_impl.1} parent=111 // pred_check
          %p542 = pneg %p538
        $region152: #{_minkowski_pruning_impl.1} parent=111 // pred_check_branch
          %544 = sbr.rel (%p542) target = $region154
        $region153: #{_minkowski_pruning_impl.1} parent=111 // pred_region
          %s545 = sshll.u32 1, 16
          %s546 = ssub.s32 %s545, 1
          loop: start=0, step=1, limit=1
          $region155: #{_minkowski_pruning_impl.1} parent=153 // loop_pre_header
            _
          $region156: #{_minkowski_pruning_impl.1} parent=153 // loop_header
            %s548 = sphi 0, %s552
            %p549 = scmp.ge.s32.totalorder %s548, 1
            %s553 = sphi [#allocation3], [#allocation3]
            %s554 = sphi %s535, %s535
          $region157: #{_minkowski_pruning_impl.1} parent=153 // loop_header_branch
            %551 = sbr.rel (%p549) target = $region161
          $region158: #{_minkowski_pruning_impl.1} parent=153 // loop_body
            %v555 = vld [vmem:[%s553] sm:%s546]
            %556 = vst [vmem:[%s554] sm:%s546] %v555
          $region159: #{_minkowski_pruning_impl.1} parent=153 // loop_footer
            %s552 = sadd.s32 1, %s548
          $region160: #{_minkowski_pruning_impl.1} parent=153 // loop_footer_branch
            %547 = sbr.rel target = $region156
          $region161: #{_minkowski_pruning_impl.1} parent=153 // loop_exit
            _
        $region154: #{_minkowski_pruning_impl.1} parent=111 // pred_fallthru
          _
        // Predicated region
        $region177: #{_minkowski_pruning_impl.1} parent=111 // pred_check
          _
        $region178: #{_minkowski_pruning_impl.1} parent=111 // pred_check_branch
          %580 = sbr.rel (0) target = $region180
        $region179: #{_minkowski_pruning_impl.1} parent=111 // pred_region
          %581 = vsyncadd %s536, 256
        $region180: #{_minkowski_pruning_impl.1} parent=111 // pred_fallthru
          _
      $region112: #{_minkowski_pruning_impl.1} parent=27 // pred_fallthru
        _
      %s582 = sand.u32 %s126, 8
      %p583 = scmp.gt.s32.totalorder %s582, 0
      // Predicated region
      $region181: #{_minkowski_pruning_impl.1} parent=27 // pred_check
        %p584 = pneg %p583
      $region182: #{_minkowski_pruning_impl.1} parent=27 // pred_check_branch
        %586 = sbr.rel (%p584) target = $region184
      $region183: #{_minkowski_pruning_impl.1} parent=27 // pred_region
        %s587 = sadd.s32 %s123, %s484
        %s588 = scalar_lea.vmem [#allocation2], %s484
        %s589 = scalar_lea.vmem %s5, %s587
        %p591 = scmp.lt.u32.totalorder 8, 8
        %p592 = pneg %p591
        // Predicated region
        $region185: #{_minkowski_pruning_impl.1} parent=183 // pred_check
          _
        $region186: #{_minkowski_pruning_impl.1} parent=183 // pred_check_branch
          %594 = sbr.rel (%p591) target = $region188
        $region187: #{_minkowski_pruning_impl.1} parent=183 // pred_region
          %s610 = sand.u32 8, 7
          %p611 = scmp.eq.s32.totalorder %s610, 0
          // Predicated region
          $region200: #{_minkowski_pruning_impl.1} parent=187 // pred_check
            %p612 = pneg %p611
          $region201: #{_minkowski_pruning_impl.1} parent=187 // pred_check_branch
            %614 = sbr.rel (%p612) target = $region203
          $region202: #{_minkowski_pruning_impl.1} parent=187 // pred_region
            loop: start=0, step=1, limit=1
            $region204: #{_minkowski_pruning_impl.1} parent=202 // loop_pre_header
              _
            $region205: #{_minkowski_pruning_impl.1} parent=202 // loop_header
              %s616 = sphi 0, %s620
              %p617 = scmp.ge.s32.totalorder %s616, 1
              %s621 = sphi %s588, %s588
              %s622 = sphi %s589, %s589
            $region206: #{_minkowski_pruning_impl.1} parent=202 // loop_header_branch
              %619 = sbr.rel (%p617) target = $region210
            $region207: #{_minkowski_pruning_impl.1} parent=202 // loop_body
              %v623 = vld [vmem:[%s621] sm:$0xff]
              %624 = vst [vmem:[%s622] sm:$0xff] %v623
            $region208: #{_minkowski_pruning_impl.1} parent=202 // loop_footer
              %s620 = sadd.s32 1, %s616
            $region209: #{_minkowski_pruning_impl.1} parent=202 // loop_footer_branch
              %615 = sbr.rel target = $region205
            $region210: #{_minkowski_pruning_impl.1} parent=202 // loop_exit
              _
          $region203: #{_minkowski_pruning_impl.1} parent=187 // pred_fallthru
            _
          %p625 = pneg %p611
          // Predicated region
          $region211: #{_minkowski_pruning_impl.1} parent=187 // pred_check
            _
          $region212: #{_minkowski_pruning_impl.1} parent=187 // pred_check_branch
            %627 = sbr.rel (%p611) target = $region214
          $region213: #{_minkowski_pruning_impl.1} parent=187 // pred_region
            %s628 = sand.u32 8, 7
          $region214: #{_minkowski_pruning_impl.1} parent=187 // pred_fallthru
            _
        $region188: #{_minkowski_pruning_impl.1} parent=183 // pred_fallthru
          _
        // Predicated region
        $region189: #{_minkowski_pruning_impl.1} parent=183 // pred_check
          %p595 = pneg %p591
        $region190: #{_minkowski_pruning_impl.1} parent=183 // pred_check_branch
          %597 = sbr.rel (%p595) target = $region192
        $region191: #{_minkowski_pruning_impl.1} parent=183 // pred_region
          %s598 = sshll.u32 1, 8
          %s599 = ssub.s32 %s598, 1
          loop: start=0, step=1, limit=1
          $region193: #{_minkowski_pruning_impl.1} parent=191 // loop_pre_header
            _
          $region194: #{_minkowski_pruning_impl.1} parent=191 // loop_header
            %s601 = sphi 0, %s605
            %p602 = scmp.ge.s32.totalorder %s601, 1
            %s606 = sphi %s588, %s588
            %s607 = sphi %s589, %s589
          $region195: #{_minkowski_pruning_impl.1} parent=191 // loop_header_branch
            %604 = sbr.rel (%p602) target = $region199
          $region196: #{_minkowski_pruning_impl.1} parent=191 // loop_body
            %v608 = vld [vmem:[%s606] sm:%s599]
            %609 = vst [vmem:[%s607] sm:%s599] %v608
          $region197: #{_minkowski_pruning_impl.1} parent=191 // loop_footer
            %s605 = sadd.s32 1, %s601
          $region198: #{_minkowski_pruning_impl.1} parent=191 // loop_footer_branch
            %600 = sbr.rel target = $region194
          $region199: #{_minkowski_pruning_impl.1} parent=191 // loop_exit
            _
        $region192: #{_minkowski_pruning_impl.1} parent=183 // pred_fallthru
          _
        // Predicated region
        $region215: #{_minkowski_pruning_impl.1} parent=183 // pred_check
          _
        $region216: #{_minkowski_pruning_impl.1} parent=183 // pred_check_branch
          %631 = sbr.rel (0) target = $region218
        $region217: #{_minkowski_pruning_impl.1} parent=183 // pred_region
          %632 = vsyncadd [#allocation4], 128
        $region218: #{_minkowski_pruning_impl.1} parent=183 // pred_fallthru
          _
        %s633 = scalar_lea.vmem [#allocation3], %s484
        %s634 = scalar_lea.vmem %s6, %s587
        %s635 = scalar_lea.sflag [#allocation4], 1
        %p637 = scmp.lt.u32.totalorder 8, 8
        %p638 = pneg %p637
        // Predicated region
        $region219: #{_minkowski_pruning_impl.1} parent=183 // pred_check
          _
        $region220: #{_minkowski_pruning_impl.1} parent=183 // pred_check_branch
          %640 = sbr.rel (%p637) target = $region222
        $region221: #{_minkowski_pruning_impl.1} parent=183 // pred_region
          %s656 = sand.u32 8, 7
          %p657 = scmp.eq.s32.totalorder %s656, 0
          // Predicated region
          $region234: #{_minkowski_pruning_impl.1} parent=221 // pred_check
            %p658 = pneg %p657
          $region235: #{_minkowski_pruning_impl.1} parent=221 // pred_check_branch
            %660 = sbr.rel (%p658) target = $region237
          $region236: #{_minkowski_pruning_impl.1} parent=221 // pred_region
            loop: start=0, step=1, limit=1
            $region238: #{_minkowski_pruning_impl.1} parent=236 // loop_pre_header
              _
            $region239: #{_minkowski_pruning_impl.1} parent=236 // loop_header
              %s662 = sphi 0, %s666
              %p663 = scmp.ge.s32.totalorder %s662, 1
              %s667 = sphi %s633, %s633
              %s668 = sphi %s634, %s634
            $region240: #{_minkowski_pruning_impl.1} parent=236 // loop_header_branch
              %665 = sbr.rel (%p663) target = $region244
            $region241: #{_minkowski_pruning_impl.1} parent=236 // loop_body
              %v669 = vld [vmem:[%s667] sm:$0xff]
              %670 = vst [vmem:[%s668] sm:$0xff] %v669
            $region242: #{_minkowski_pruning_impl.1} parent=236 // loop_footer
              %s666 = sadd.s32 1, %s662
            $region243: #{_minkowski_pruning_impl.1} parent=236 // loop_footer_branch
              %661 = sbr.rel target = $region239
            $region244: #{_minkowski_pruning_impl.1} parent=236 // loop_exit
              _
          $region237: #{_minkowski_pruning_impl.1} parent=221 // pred_fallthru
            _
          %p671 = pneg %p657
          // Predicated region
          $region245: #{_minkowski_pruning_impl.1} parent=221 // pred_check
            _
          $region246: #{_minkowski_pruning_impl.1} parent=221 // pred_check_branch
            %673 = sbr.rel (%p657) target = $region248
          $region247: #{_minkowski_pruning_impl.1} parent=221 // pred_region
            %s674 = sand.u32 8, 7
          $region248: #{_minkowski_pruning_impl.1} parent=221 // pred_fallthru
            _
        $region222: #{_minkowski_pruning_impl.1} parent=183 // pred_fallthru
          _
        // Predicated region
        $region223: #{_minkowski_pruning_impl.1} parent=183 // pred_check
          %p641 = pneg %p637
        $region224: #{_minkowski_pruning_impl.1} parent=183 // pred_check_branch
          %643 = sbr.rel (%p641) target = $region226
        $region225: #{_minkowski_pruning_impl.1} parent=183 // pred_region
          %s644 = sshll.u32 1, 8
          %s645 = ssub.s32 %s644, 1
          loop: start=0, step=1, limit=1
          $region227: #{_minkowski_pruning_impl.1} parent=225 // loop_pre_header
            _
          $region228: #{_minkowski_pruning_impl.1} parent=225 // loop_header
            %s647 = sphi 0, %s651
            %p648 = scmp.ge.s32.totalorder %s647, 1
            %s652 = sphi %s633, %s633
            %s653 = sphi %s634, %s634
          $region229: #{_minkowski_pruning_impl.1} parent=225 // loop_header_branch
            %650 = sbr.rel (%p648) target = $region233
          $region230: #{_minkowski_pruning_impl.1} parent=225 // loop_body
            %v654 = vld [vmem:[%s652] sm:%s645]
            %655 = vst [vmem:[%s653] sm:%s645] %v654
          $region231: #{_minkowski_pruning_impl.1} parent=225 // loop_footer
            %s651 = sadd.s32 1, %s647
          $region232: #{_minkowski_pruning_impl.1} parent=225 // loop_footer_branch
            %646 = sbr.rel target = $region228
          $region233: #{_minkowski_pruning_impl.1} parent=225 // loop_exit
            _
        $region226: #{_minkowski_pruning_impl.1} parent=183 // pred_fallthru
          _
        // Predicated region
        $region249: #{_minkowski_pruning_impl.1} parent=183 // pred_check
          _
        $region250: #{_minkowski_pruning_impl.1} parent=183 // pred_check_branch
          %677 = sbr.rel (0) target = $region252
        $region251: #{_minkowski_pruning_impl.1} parent=183 // pred_region
          %678 = vsyncadd %s635, 128
        $region252: #{_minkowski_pruning_impl.1} parent=183 // pred_fallthru
          _
      $region184: #{_minkowski_pruning_impl.1} parent=27 // pred_fallthru
        _
      %s679 = sadd.s32 %s484, %s582
      %s680 = sand.u32 %s126, 4
      %p681 = scmp.gt.s32.totalorder %s680, 0
      // Predicated region
      $region253: #{_minkowski_pruning_impl.1} parent=27 // pred_check
        %p682 = pneg %p681
      $region254: #{_minkowski_pruning_impl.1} parent=27 // pred_check_branch
        %684 = sbr.rel (%p682) target = $region256
      $region255: #{_minkowski_pruning_impl.1} parent=27 // pred_region
        %s685 = sadd.s32 %s123, %s679
        %s686 = scalar_lea.vmem [#allocation2], %s679
        %s687 = scalar_lea.vmem %s5, %s685
        %p689 = scmp.lt.u32.totalorder 4, 8
        %p690 = pneg %p689
        // Predicated region
        $region257: #{_minkowski_pruning_impl.1} parent=255 // pred_check
          _
        $region258: #{_minkowski_pruning_impl.1} parent=255 // pred_check_branch
          %692 = sbr.rel (%p689) target = $region260
        $region259: #{_minkowski_pruning_impl.1} parent=255 // pred_region
          %s708 = sand.u32 4, 7
          %p709 = scmp.eq.s32.totalorder %s708, 0
          %p710 = pneg %p709
          // Predicated region
          $region272: #{_minkowski_pruning_impl.1} parent=259 // pred_check
            _
          $region273: #{_minkowski_pruning_impl.1} parent=259 // pred_check_branch
            %712 = sbr.rel (%p709) target = $region275
          $region274: #{_minkowski_pruning_impl.1} parent=259 // pred_region
            %s713 = sand.u32 4, 7
            %s714 = ssub.s32 4, %s713
            %s715 = scalar_lea.vmem %s686, %s714 [#allocation2]
            %s716 = ssub.s32 4, %s713
            %s717 = scalar_lea.vmem %s687, %s716
            %s718 = sshll.u32 1, %s713
            %s719 = ssub.s32 %s718, 1
            loop: start=0, step=1, limit=1
            $region276: #{_minkowski_pruning_impl.1} parent=274 // loop_pre_header
              _
            $region277: #{_minkowski_pruning_impl.1} parent=274 // loop_header
              %s721 = sphi 0, %s725
              %p722 = scmp.ge.s32.totalorder %s721, 1
              %s726 = sphi %s715, %s715
              %s727 = sphi %s717, %s717
            $region278: #{_minkowski_pruning_impl.1} parent=274 // loop_header_branch
              %724 = sbr.rel (%p722) target = $region282
            $region279: #{_minkowski_pruning_impl.1} parent=274 // loop_body
              %v728 = vld [vmem:[%s726] sm:%s719]
              %729 = vst [vmem:[%s727] sm:%s719] %v728
            $region280: #{_minkowski_pruning_impl.1} parent=274 // loop_footer
              %s725 = sadd.s32 1, %s721
            $region281: #{_minkowski_pruning_impl.1} parent=274 // loop_footer_branch
              %720 = sbr.rel target = $region277
            $region282: #{_minkowski_pruning_impl.1} parent=274 // loop_exit
              _
          $region275: #{_minkowski_pruning_impl.1} parent=259 // pred_fallthru
            _
        $region260: #{_minkowski_pruning_impl.1} parent=255 // pred_fallthru
          _
        // Predicated region
        $region261: #{_minkowski_pruning_impl.1} parent=255 // pred_check
          %p693 = pneg %p689
        $region262: #{_minkowski_pruning_impl.1} parent=255 // pred_check_branch
          %695 = sbr.rel (%p693) target = $region264
        $region263: #{_minkowski_pruning_impl.1} parent=255 // pred_region
          %s696 = sshll.u32 1, 4
          %s697 = ssub.s32 %s696, 1
          loop: start=0, step=1, limit=1
          $region265: #{_minkowski_pruning_impl.1} parent=263 // loop_pre_header
            _
          $region266: #{_minkowski_pruning_impl.1} parent=263 // loop_header
            %s699 = sphi 0, %s703
            %p700 = scmp.ge.s32.totalorder %s699, 1
            %s704 = sphi %s686, %s686
            %s705 = sphi %s687, %s687
          $region267: #{_minkowski_pruning_impl.1} parent=263 // loop_header_branch
            %702 = sbr.rel (%p700) target = $region271
          $region268: #{_minkowski_pruning_impl.1} parent=263 // loop_body
            %v706 = vld [vmem:[%s704] sm:%s697]
            %707 = vst [vmem:[%s705] sm:%s697] %v706
          $region269: #{_minkowski_pruning_impl.1} parent=263 // loop_footer
            %s703 = sadd.s32 1, %s699
          $region270: #{_minkowski_pruning_impl.1} parent=263 // loop_footer_branch
            %698 = sbr.rel target = $region266
          $region271: #{_minkowski_pruning_impl.1} parent=263 // loop_exit
            _
        $region264: #{_minkowski_pruning_impl.1} parent=255 // pred_fallthru
          _
        // Predicated region
        $region283: #{_minkowski_pruning_impl.1} parent=255 // pred_check
          _
        $region284: #{_minkowski_pruning_impl.1} parent=255 // pred_check_branch
          %732 = sbr.rel (0) target = $region286
        $region285: #{_minkowski_pruning_impl.1} parent=255 // pred_region
          %733 = vsyncadd [#allocation4], 64
        $region286: #{_minkowski_pruning_impl.1} parent=255 // pred_fallthru
          _
        %s734 = scalar_lea.vmem [#allocation3], %s679
        %s735 = scalar_lea.vmem %s6, %s685
        %s736 = scalar_lea.sflag [#allocation4], 1
        %p738 = scmp.lt.u32.totalorder 4, 8
        %p739 = pneg %p738
        // Predicated region
        $region287: #{_minkowski_pruning_impl.1} parent=255 // pred_check
          _
        $region288: #{_minkowski_pruning_impl.1} parent=255 // pred_check_branch
          %741 = sbr.rel (%p738) target = $region290
        $region289: #{_minkowski_pruning_impl.1} parent=255 // pred_region
          %s757 = sand.u32 4, 7
          %p758 = scmp.eq.s32.totalorder %s757, 0
          %p759 = pneg %p758
          // Predicated region
          $region302: #{_minkowski_pruning_impl.1} parent=289 // pred_check
            _
          $region303: #{_minkowski_pruning_impl.1} parent=289 // pred_check_branch
            %761 = sbr.rel (%p758) target = $region305
          $region304: #{_minkowski_pruning_impl.1} parent=289 // pred_region
            %s762 = sand.u32 4, 7
            %s763 = ssub.s32 4, %s762
            %s764 = scalar_lea.vmem %s734, %s763 [#allocation3]
            %s765 = ssub.s32 4, %s762
            %s766 = scalar_lea.vmem %s735, %s765
            %s767 = sshll.u32 1, %s762
            %s768 = ssub.s32 %s767, 1
            loop: start=0, step=1, limit=1
            $region306: #{_minkowski_pruning_impl.1} parent=304 // loop_pre_header
              _
            $region307: #{_minkowski_pruning_impl.1} parent=304 // loop_header
              %s770 = sphi 0, %s774
              %p771 = scmp.ge.s32.totalorder %s770, 1
              %s775 = sphi %s764, %s764
              %s776 = sphi %s766, %s766
            $region308: #{_minkowski_pruning_impl.1} parent=304 // loop_header_branch
              %773 = sbr.rel (%p771) target = $region312
            $region309: #{_minkowski_pruning_impl.1} parent=304 // loop_body
              %v777 = vld [vmem:[%s775] sm:%s768]
              %778 = vst [vmem:[%s776] sm:%s768] %v777
            $region310: #{_minkowski_pruning_impl.1} parent=304 // loop_footer
              %s774 = sadd.s32 1, %s770
            $region311: #{_minkowski_pruning_impl.1} parent=304 // loop_footer_branch
              %769 = sbr.rel target = $region307
            $region312: #{_minkowski_pruning_impl.1} parent=304 // loop_exit
              _
          $region305: #{_minkowski_pruning_impl.1} parent=289 // pred_fallthru
            _
        $region290: #{_minkowski_pruning_impl.1} parent=255 // pred_fallthru
          _
        // Predicated region
        $region291: #{_minkowski_pruning_impl.1} parent=255 // pred_check
          %p742 = pneg %p738
        $region292: #{_minkowski_pruning_impl.1} parent=255 // pred_check_branch
          %744 = sbr.rel (%p742) target = $region294
        $region293: #{_minkowski_pruning_impl.1} parent=255 // pred_region
          %s745 = sshll.u32 1, 4
          %s746 = ssub.s32 %s745, 1
          loop: start=0, step=1, limit=1
          $region295: #{_minkowski_pruning_impl.1} parent=293 // loop_pre_header
            _
          $region296: #{_minkowski_pruning_impl.1} parent=293 // loop_header
            %s748 = sphi 0, %s752
            %p749 = scmp.ge.s32.totalorder %s748, 1
            %s753 = sphi %s734, %s734
            %s754 = sphi %s735, %s735
          $region297: #{_minkowski_pruning_impl.1} parent=293 // loop_header_branch
            %751 = sbr.rel (%p749) target = $region301
          $region298: #{_minkowski_pruning_impl.1} parent=293 // loop_body
            %v755 = vld [vmem:[%s753] sm:%s746]
            %756 = vst [vmem:[%s754] sm:%s746] %v755
          $region299: #{_minkowski_pruning_impl.1} parent=293 // loop_footer
            %s752 = sadd.s32 1, %s748
          $region300: #{_minkowski_pruning_impl.1} parent=293 // loop_footer_branch
            %747 = sbr.rel target = $region296
          $region301: #{_minkowski_pruning_impl.1} parent=293 // loop_exit
            _
        $region294: #{_minkowski_pruning_impl.1} parent=255 // pred_fallthru
          _
        // Predicated region
        $region313: #{_minkowski_pruning_impl.1} parent=255 // pred_check
          _
        $region314: #{_minkowski_pruning_impl.1} parent=255 // pred_check_branch
          %781 = sbr.rel (0) target = $region316
        $region315: #{_minkowski_pruning_impl.1} parent=255 // pred_region
          %782 = vsyncadd %s736, 64
        $region316: #{_minkowski_pruning_impl.1} parent=255 // pred_fallthru
          _
      $region256: #{_minkowski_pruning_impl.1} parent=27 // pred_fallthru
        _
      %s783 = sadd.s32 %s679, %s680
      %s784 = sand.u32 %s126, 2
      %p785 = scmp.gt.s32.totalorder %s784, 0
      // Predicated region
      $region317: #{_minkowski_pruning_impl.1} parent=27 // pred_check
        %p786 = pneg %p785
      $region318: #{_minkowski_pruning_impl.1} parent=27 // pred_check_branch
        %788 = sbr.rel (%p786) target = $region320
      $region319: #{_minkowski_pruning_impl.1} parent=27 // pred_region
        %s789 = sadd.s32 %s123, %s783
        %s790 = scalar_lea.vmem [#allocation2], %s783
        %s791 = scalar_lea.vmem %s5, %s789
        %p793 = scmp.lt.u32.totalorder 2, 8
        %p794 = pneg %p793
        // Predicated region
        $region321: #{_minkowski_pruning_impl.1} parent=319 // pred_check
          _
        $region322: #{_minkowski_pruning_impl.1} parent=319 // pred_check_branch
          %796 = sbr.rel (%p793) target = $region324
        $region323: #{_minkowski_pruning_impl.1} parent=319 // pred_region
          %s812 = sand.u32 2, 7
          %p813 = scmp.eq.s32.totalorder %s812, 0
          %p814 = pneg %p813
          // Predicated region
          $region336: #{_minkowski_pruning_impl.1} parent=323 // pred_check
            _
          $region337: #{_minkowski_pruning_impl.1} parent=323 // pred_check_branch
            %816 = sbr.rel (%p813) target = $region339
          $region338: #{_minkowski_pruning_impl.1} parent=323 // pred_region
            %s817 = sand.u32 2, 7
            %s818 = ssub.s32 2, %s817
            %s819 = scalar_lea.vmem %s790, %s818 [#allocation2]
            %s820 = ssub.s32 2, %s817
            %s821 = scalar_lea.vmem %s791, %s820
            %s822 = sshll.u32 1, %s817
            %s823 = ssub.s32 %s822, 1
            loop: start=0, step=1, limit=1
            $region340: #{_minkowski_pruning_impl.1} parent=338 // loop_pre_header
              _
            $region341: #{_minkowski_pruning_impl.1} parent=338 // loop_header
              %s825 = sphi 0, %s829
              %p826 = scmp.ge.s32.totalorder %s825, 1
              %s830 = sphi %s819, %s819
              %s831 = sphi %s821, %s821
            $region342: #{_minkowski_pruning_impl.1} parent=338 // loop_header_branch
              %828 = sbr.rel (%p826) target = $region346
            $region343: #{_minkowski_pruning_impl.1} parent=338 // loop_body
              %v832 = vld [vmem:[%s830] sm:%s823]
              %833 = vst [vmem:[%s831] sm:%s823] %v832
            $region344: #{_minkowski_pruning_impl.1} parent=338 // loop_footer
              %s829 = sadd.s32 1, %s825
            $region345: #{_minkowski_pruning_impl.1} parent=338 // loop_footer_branch
              %824 = sbr.rel target = $region341
            $region346: #{_minkowski_pruning_impl.1} parent=338 // loop_exit
              _
          $region339: #{_minkowski_pruning_impl.1} parent=323 // pred_fallthru
            _
        $region324: #{_minkowski_pruning_impl.1} parent=319 // pred_fallthru
          _
        // Predicated region
        $region325: #{_minkowski_pruning_impl.1} parent=319 // pred_check
          %p797 = pneg %p793
        $region326: #{_minkowski_pruning_impl.1} parent=319 // pred_check_branch
          %799 = sbr.rel (%p797) target = $region328
        $region327: #{_minkowski_pruning_impl.1} parent=319 // pred_region
          %s800 = sshll.u32 1, 2
          %s801 = ssub.s32 %s800, 1
          loop: start=0, step=1, limit=1
          $region329: #{_minkowski_pruning_impl.1} parent=327 // loop_pre_header
            _
          $region330: #{_minkowski_pruning_impl.1} parent=327 // loop_header
            %s803 = sphi 0, %s807
            %p804 = scmp.ge.s32.totalorder %s803, 1
            %s808 = sphi %s790, %s790
            %s809 = sphi %s791, %s791
          $region331: #{_minkowski_pruning_impl.1} parent=327 // loop_header_branch
            %806 = sbr.rel (%p804) target = $region335
          $region332: #{_minkowski_pruning_impl.1} parent=327 // loop_body
            %v810 = vld [vmem:[%s808] sm:%s801]
            %811 = vst [vmem:[%s809] sm:%s801] %v810
          $region333: #{_minkowski_pruning_impl.1} parent=327 // loop_footer
            %s807 = sadd.s32 1, %s803
          $region334: #{_minkowski_pruning_impl.1} parent=327 // loop_footer_branch
            %802 = sbr.rel target = $region330
          $region335: #{_minkowski_pruning_impl.1} parent=327 // loop_exit
            _
        $region328: #{_minkowski_pruning_impl.1} parent=319 // pred_fallthru
          _
        // Predicated region
        $region347: #{_minkowski_pruning_impl.1} parent=319 // pred_check
          _
        $region348: #{_minkowski_pruning_impl.1} parent=319 // pred_check_branch
          %836 = sbr.rel (0) target = $region350
        $region349: #{_minkowski_pruning_impl.1} parent=319 // pred_region
          %837 = vsyncadd [#allocation4], 32
        $region350: #{_minkowski_pruning_impl.1} parent=319 // pred_fallthru
          _
        %s838 = scalar_lea.vmem [#allocation3], %s783
        %s839 = scalar_lea.vmem %s6, %s789
        %s840 = scalar_lea.sflag [#allocation4], 1
        %p842 = scmp.lt.u32.totalorder 2, 8
        %p843 = pneg %p842
        // Predicated region
        $region351: #{_minkowski_pruning_impl.1} parent=319 // pred_check
          _
        $region352: #{_minkowski_pruning_impl.1} parent=319 // pred_check_branch
          %845 = sbr.rel (%p842) target = $region354
        $region353: #{_minkowski_pruning_impl.1} parent=319 // pred_region
          %s861 = sand.u32 2, 7
          %p862 = scmp.eq.s32.totalorder %s861, 0
          %p863 = pneg %p862
          // Predicated region
          $region366: #{_minkowski_pruning_impl.1} parent=353 // pred_check
            _
          $region367: #{_minkowski_pruning_impl.1} parent=353 // pred_check_branch
            %865 = sbr.rel (%p862) target = $region369
          $region368: #{_minkowski_pruning_impl.1} parent=353 // pred_region
            %s866 = sand.u32 2, 7
            %s867 = ssub.s32 2, %s866
            %s868 = scalar_lea.vmem %s838, %s867 [#allocation3]
            %s869 = ssub.s32 2, %s866
            %s870 = scalar_lea.vmem %s839, %s869
            %s871 = sshll.u32 1, %s866
            %s872 = ssub.s32 %s871, 1
            loop: start=0, step=1, limit=1
            $region370: #{_minkowski_pruning_impl.1} parent=368 // loop_pre_header
              _
            $region371: #{_minkowski_pruning_impl.1} parent=368 // loop_header
              %s874 = sphi 0, %s878
              %p875 = scmp.ge.s32.totalorder %s874, 1
              %s879 = sphi %s868, %s868
              %s880 = sphi %s870, %s870
            $region372: #{_minkowski_pruning_impl.1} parent=368 // loop_header_branch
              %877 = sbr.rel (%p875) target = $region376
            $region373: #{_minkowski_pruning_impl.1} parent=368 // loop_body
              %v881 = vld [vmem:[%s879] sm:%s872]
              %882 = vst [vmem:[%s880] sm:%s872] %v881
            $region374: #{_minkowski_pruning_impl.1} parent=368 // loop_footer
              %s878 = sadd.s32 1, %s874
            $region375: #{_minkowski_pruning_impl.1} parent=368 // loop_footer_branch
              %873 = sbr.rel target = $region371
            $region376: #{_minkowski_pruning_impl.1} parent=368 // loop_exit
              _
          $region369: #{_minkowski_pruning_impl.1} parent=353 // pred_fallthru
            _
        $region354: #{_minkowski_pruning_impl.1} parent=319 // pred_fallthru
          _
        // Predicated region
        $region355: #{_minkowski_pruning_impl.1} parent=319 // pred_check
          %p846 = pneg %p842
        $region356: #{_minkowski_pruning_impl.1} parent=319 // pred_check_branch
          %848 = sbr.rel (%p846) target = $region358
        $region357: #{_minkowski_pruning_impl.1} parent=319 // pred_region
          %s849 = sshll.u32 1, 2
          %s850 = ssub.s32 %s849, 1
          loop: start=0, step=1, limit=1
          $region359: #{_minkowski_pruning_impl.1} parent=357 // loop_pre_header
            _
          $region360: #{_minkowski_pruning_impl.1} parent=357 // loop_header
            %s852 = sphi 0, %s856
            %p853 = scmp.ge.s32.totalorder %s852, 1
            %s857 = sphi %s838, %s838
            %s858 = sphi %s839, %s839
          $region361: #{_minkowski_pruning_impl.1} parent=357 // loop_header_branch
            %855 = sbr.rel (%p853) target = $region365
          $region362: #{_minkowski_pruning_impl.1} parent=357 // loop_body
            %v859 = vld [vmem:[%s857] sm:%s850]
            %860 = vst [vmem:[%s858] sm:%s850] %v859
          $region363: #{_minkowski_pruning_impl.1} parent=357 // loop_footer
            %s856 = sadd.s32 1, %s852
          $region364: #{_minkowski_pruning_impl.1} parent=357 // loop_footer_branch
            %851 = sbr.rel target = $region360
          $region365: #{_minkowski_pruning_impl.1} parent=357 // loop_exit
            _
        $region358: #{_minkowski_pruning_impl.1} parent=319 // pred_fallthru
          _
        // Predicated region
        $region377: #{_minkowski_pruning_impl.1} parent=319 // pred_check
          _
        $region378: #{_minkowski_pruning_impl.1} parent=319 // pred_check_branch
          %885 = sbr.rel (0) target = $region380
        $region379: #{_minkowski_pruning_impl.1} parent=319 // pred_region
          %886 = vsyncadd %s840, 32
        $region380: #{_minkowski_pruning_impl.1} parent=319 // pred_fallthru
          _
      $region320: #{_minkowski_pruning_impl.1} parent=27 // pred_fallthru
        _
      %s887 = sadd.s32 %s783, %s784
      %s888 = sand.u32 %s126, 1
      %p889 = scmp.gt.s32.totalorder %s888, 0
      // Predicated region
      $region381: #{_minkowski_pruning_impl.1} parent=27 // pred_check
        %p890 = pneg %p889
      $region382: #{_minkowski_pruning_impl.1} parent=27 // pred_check_branch
        %892 = sbr.rel (%p890) target = $region384
      $region383: #{_minkowski_pruning_impl.1} parent=27 // pred_region
        %s893 = sadd.s32 %s123, %s887
        %s894 = scalar_lea.vmem [#allocation2], %s887
        %s895 = scalar_lea.vmem %s5, %s893
        %p897 = scmp.lt.u32.totalorder 1, 8
        %p898 = pneg %p897
        // Predicated region
        $region385: #{_minkowski_pruning_impl.1} parent=383 // pred_check
          _
        $region386: #{_minkowski_pruning_impl.1} parent=383 // pred_check_branch
          %900 = sbr.rel (%p897) target = $region388
        $region387: #{_minkowski_pruning_impl.1} parent=383 // pred_region
          %s916 = sand.u32 1, 7
          %p917 = scmp.eq.s32.totalorder %s916, 0
          %p918 = pneg %p917
          // Predicated region
          $region400: #{_minkowski_pruning_impl.1} parent=387 // pred_check
            _
          $region401: #{_minkowski_pruning_impl.1} parent=387 // pred_check_branch
            %920 = sbr.rel (%p917) target = $region403
          $region402: #{_minkowski_pruning_impl.1} parent=387 // pred_region
            %s921 = sand.u32 1, 7
            %s922 = ssub.s32 1, %s921
            %s923 = scalar_lea.vmem %s894, %s922 [#allocation2]
            %s924 = ssub.s32 1, %s921
            %s925 = scalar_lea.vmem %s895, %s924
            %s926 = sshll.u32 1, %s921
            %s927 = ssub.s32 %s926, 1
            loop: start=0, step=1, limit=1
            $region404: #{_minkowski_pruning_impl.1} parent=402 // loop_pre_header
              _
            $region405: #{_minkowski_pruning_impl.1} parent=402 // loop_header
              %s929 = sphi 0, %s933
              %p930 = scmp.ge.s32.totalorder %s929, 1
              %s934 = sphi %s923, %s923
              %s935 = sphi %s925, %s925
            $region406: #{_minkowski_pruning_impl.1} parent=402 // loop_header_branch
              %932 = sbr.rel (%p930) target = $region410
            $region407: #{_minkowski_pruning_impl.1} parent=402 // loop_body
              %v936 = vld [vmem:[%s934] sm:%s927]
              %937 = vst [vmem:[%s935] sm:%s927] %v936
            $region408: #{_minkowski_pruning_impl.1} parent=402 // loop_footer
              %s933 = sadd.s32 1, %s929
            $region409: #{_minkowski_pruning_impl.1} parent=402 // loop_footer_branch
              %928 = sbr.rel target = $region405
            $region410: #{_minkowski_pruning_impl.1} parent=402 // loop_exit
              _
          $region403: #{_minkowski_pruning_impl.1} parent=387 // pred_fallthru
            _
        $region388: #{_minkowski_pruning_impl.1} parent=383 // pred_fallthru
          _
        // Predicated region
        $region389: #{_minkowski_pruning_impl.1} parent=383 // pred_check
          %p901 = pneg %p897
        $region390: #{_minkowski_pruning_impl.1} parent=383 // pred_check_branch
          %903 = sbr.rel (%p901) target = $region392
        $region391: #{_minkowski_pruning_impl.1} parent=383 // pred_region
          %s904 = sshll.u32 1, 1
          %s905 = ssub.s32 %s904, 1
          loop: start=0, step=1, limit=1
          $region393: #{_minkowski_pruning_impl.1} parent=391 // loop_pre_header
            _
          $region394: #{_minkowski_pruning_impl.1} parent=391 // loop_header
            %s907 = sphi 0, %s911
            %p908 = scmp.ge.s32.totalorder %s907, 1
            %s912 = sphi %s894, %s894
            %s913 = sphi %s895, %s895
          $region395: #{_minkowski_pruning_impl.1} parent=391 // loop_header_branch
            %910 = sbr.rel (%p908) target = $region399
          $region396: #{_minkowski_pruning_impl.1} parent=391 // loop_body
            %v914 = vld [vmem:[%s912] sm:%s905]
            %915 = vst [vmem:[%s913] sm:%s905] %v914
          $region397: #{_minkowski_pruning_impl.1} parent=391 // loop_footer
            %s911 = sadd.s32 1, %s907
          $region398: #{_minkowski_pruning_impl.1} parent=391 // loop_footer_branch
            %906 = sbr.rel target = $region394
          $region399: #{_minkowski_pruning_impl.1} parent=391 // loop_exit
            _
        $region392: #{_minkowski_pruning_impl.1} parent=383 // pred_fallthru
          _
        // Predicated region
        $region411: #{_minkowski_pruning_impl.1} parent=383 // pred_check
          _
        $region412: #{_minkowski_pruning_impl.1} parent=383 // pred_check_branch
          %940 = sbr.rel (0) target = $region414
        $region413: #{_minkowski_pruning_impl.1} parent=383 // pred_region
          %941 = vsyncadd [#allocation4], 16
        $region414: #{_minkowski_pruning_impl.1} parent=383 // pred_fallthru
          _
        %s942 = scalar_lea.vmem [#allocation3], %s887
        %s943 = scalar_lea.vmem %s6, %s893
        %s944 = scalar_lea.sflag [#allocation4], 1
        %p946 = scmp.lt.u32.totalorder 1, 8
        %p947 = pneg %p946
        // Predicated region
        $region415: #{_minkowski_pruning_impl.1} parent=383 // pred_check
          _
        $region416: #{_minkowski_pruning_impl.1} parent=383 // pred_check_branch
          %949 = sbr.rel (%p946) target = $region418
        $region417: #{_minkowski_pruning_impl.1} parent=383 // pred_region
          %s965 = sand.u32 1, 7
          %p966 = scmp.eq.s32.totalorder %s965, 0
          %p967 = pneg %p966
          // Predicated region
          $region430: #{_minkowski_pruning_impl.1} parent=417 // pred_check
            _
          $region431: #{_minkowski_pruning_impl.1} parent=417 // pred_check_branch
            %969 = sbr.rel (%p966) target = $region433
          $region432: #{_minkowski_pruning_impl.1} parent=417 // pred_region
            %s970 = sand.u32 1, 7
            %s971 = ssub.s32 1, %s970
            %s972 = scalar_lea.vmem %s942, %s971 [#allocation3]
            %s973 = ssub.s32 1, %s970
            %s974 = scalar_lea.vmem %s943, %s973
            %s975 = sshll.u32 1, %s970
            %s976 = ssub.s32 %s975, 1
            loop: start=0, step=1, limit=1
            $region434: #{_minkowski_pruning_impl.1} parent=432 // loop_pre_header
              _
            $region435: #{_minkowski_pruning_impl.1} parent=432 // loop_header
              %s978 = sphi 0, %s982
              %p979 = scmp.ge.s32.totalorder %s978, 1
              %s983 = sphi %s972, %s972
              %s984 = sphi %s974, %s974
            $region436: #{_minkowski_pruning_impl.1} parent=432 // loop_header_branch
              %981 = sbr.rel (%p979) target = $region440
            $region437: #{_minkowski_pruning_impl.1} parent=432 // loop_body
              %v985 = vld [vmem:[%s983] sm:%s976]
              %986 = vst [vmem:[%s984] sm:%s976] %v985
            $region438: #{_minkowski_pruning_impl.1} parent=432 // loop_footer
              %s982 = sadd.s32 1, %s978
            $region439: #{_minkowski_pruning_impl.1} parent=432 // loop_footer_branch
              %977 = sbr.rel target = $region435
            $region440: #{_minkowski_pruning_impl.1} parent=432 // loop_exit
              _
          $region433: #{_minkowski_pruning_impl.1} parent=417 // pred_fallthru
            _
        $region418: #{_minkowski_pruning_impl.1} parent=383 // pred_fallthru
          _
        // Predicated region
        $region419: #{_minkowski_pruning_impl.1} parent=383 // pred_check
          %p950 = pneg %p946
        $region420: #{_minkowski_pruning_impl.1} parent=383 // pred_check_branch
          %952 = sbr.rel (%p950) target = $region422
        $region421: #{_minkowski_pruning_impl.1} parent=383 // pred_region
          %s953 = sshll.u32 1, 1
          %s954 = ssub.s32 %s953, 1
          loop: start=0, step=1, limit=1
          $region423: #{_minkowski_pruning_impl.1} parent=421 // loop_pre_header
            _
          $region424: #{_minkowski_pruning_impl.1} parent=421 // loop_header
            %s956 = sphi 0, %s960
            %p957 = scmp.ge.s32.totalorder %s956, 1
            %s961 = sphi %s942, %s942
            %s962 = sphi %s943, %s943
          $region425: #{_minkowski_pruning_impl.1} parent=421 // loop_header_branch
            %959 = sbr.rel (%p957) target = $region429
          $region426: #{_minkowski_pruning_impl.1} parent=421 // loop_body
            %v963 = vld [vmem:[%s961] sm:%s954]
            %964 = vst [vmem:[%s962] sm:%s954] %v963
          $region427: #{_minkowski_pruning_impl.1} parent=421 // loop_footer
            %s960 = sadd.s32 1, %s956
          $region428: #{_minkowski_pruning_impl.1} parent=421 // loop_footer_branch
            %955 = sbr.rel target = $region424
          $region429: #{_minkowski_pruning_impl.1} parent=421 // loop_exit
            _
        $region422: #{_minkowski_pruning_impl.1} parent=383 // pred_fallthru
          _
        // Predicated region
        $region441: #{_minkowski_pruning_impl.1} parent=383 // pred_check
          _
        $region442: #{_minkowski_pruning_impl.1} parent=383 // pred_check_branch
          %989 = sbr.rel (0) target = $region444
        $region443: #{_minkowski_pruning_impl.1} parent=383 // pred_region
          %990 = vsyncadd %s944, 16
        $region444: #{_minkowski_pruning_impl.1} parent=383 // pred_fallthru
          _
      $region384: #{_minkowski_pruning_impl.1} parent=27 // pred_fallthru
        _
      // Predicated region
      $region445: #{_minkowski_pruning_impl.1} parent=27 // pred_check
        %p991 = pneg %p485
      $region446: #{_minkowski_pruning_impl.1} parent=27 // pred_check_branch
        %993 = sbr.rel (%p991) target = $region448
      $region447: #{_minkowski_pruning_impl.1} parent=27 // pred_region
        %s994 = smul.u32 16, 1
        %s995 = sshll.u32 %s994, 4
        %996 = dma.done [#allocation4], %s995
        %s997 = scalar_lea.sflag [#allocation4], 1
        %s998 = sshll.u32 %s994, 4
        %999 = dma.done %s997, %s998
      $region448: #{_minkowski_pruning_impl.1} parent=27 // pred_fallthru
        _
      // Predicated region
      $region449: #{_minkowski_pruning_impl.1} parent=27 // pred_check
        %p1000 = pneg %p583
      $region450: #{_minkowski_pruning_impl.1} parent=27 // pred_check_branch
        %1002 = sbr.rel (%p1000) target = $region452
      $region451: #{_minkowski_pruning_impl.1} parent=27 // pred_region
        %s1003 = smul.u32 8, 1
        %s1004 = sshll.u32 %s1003, 4
        %1005 = dma.done [#allocation4], %s1004
        %s1006 = scalar_lea.sflag [#allocation4], 1
        %s1007 = sshll.u32 %s1003, 4
        %1008 = dma.done %s1006, %s1007
      $region452: #{_minkowski_pruning_impl.1} parent=27 // pred_fallthru
        _
      // Predicated region
      $region453: #{_minkowski_pruning_impl.1} parent=27 // pred_check
        %p1009 = pneg %p681
      $region454: #{_minkowski_pruning_impl.1} parent=27 // pred_check_branch
        %1011 = sbr.rel (%p1009) target = $region456
      $region455: #{_minkowski_pruning_impl.1} parent=27 // pred_region
        %s1012 = smul.u32 4, 1
        %s1013 = sshll.u32 %s1012, 4
        %1014 = dma.done [#allocation4], %s1013
        %s1015 = scalar_lea.sflag [#allocation4], 1
        %s1016 = sshll.u32 %s1012, 4
        %1017 = dma.done %s1015, %s1016
      $region456: #{_minkowski_pruning_impl.1} parent=27 // pred_fallthru
        _
      // Predicated region
      $region457: #{_minkowski_pruning_impl.1} parent=27 // pred_check
        %p1018 = pneg %p785
      $region458: #{_minkowski_pruning_impl.1} parent=27 // pred_check_branch
        %1020 = sbr.rel (%p1018) target = $region460
      $region459: #{_minkowski_pruning_impl.1} parent=27 // pred_region
        %s1021 = smul.u32 2, 1
        %s1022 = sshll.u32 %s1021, 4
        %1023 = dma.done [#allocation4], %s1022
        %s1024 = scalar_lea.sflag [#allocation4], 1
        %s1025 = sshll.u32 %s1021, 4
        %1026 = dma.done %s1024, %s1025
      $region460: #{_minkowski_pruning_impl.1} parent=27 // pred_fallthru
        _
      // Predicated region
      $region461: #{_minkowski_pruning_impl.1} parent=27 // pred_check
        %p1027 = pneg %p889
      $region462: #{_minkowski_pruning_impl.1} parent=27 // pred_check_branch
        %1029 = sbr.rel (%p1027) target = $region464
      $region463: #{_minkowski_pruning_impl.1} parent=27 // pred_region
        %s1030 = smul.u32 1, 1
        %s1031 = sshll.u32 %s1030, 4
        %1032 = dma.done [#allocation4], %s1031
        %s1033 = scalar_lea.sflag [#allocation4], 1
        %s1034 = sshll.u32 %s1030, 4
        %1035 = dma.done %s1033, %s1034
      $region464: #{_minkowski_pruning_impl.1} parent=27 // pred_fallthru
        _
    $region28: #{_minkowski_pruning_impl.1} parent=5 // pred_fallthru
      _
  $region6: #{_minkowski_pruning_impl.1} parent=0 // loop_footer
    %s23 = sadd.s32 1, %s19
  $region7: #{_minkowski_pruning_impl.1} parent=0 // loop_footer_branch
    %18 = sbr.rel target = $region3
  $region8: #{_minkowski_pruning_impl.1} parent=0 // loop_exit
    _
  %1036 = vsyncmov [#allocation4]
  %s1037 = vpop.sfrf %1036
  %p1038 = scmp.eq.s32.totalorder %s1037, 0
  %p1039 = pneg %p1038
  %1041 = shalt.err (%p1039)
  %s1042 = scalar_lea.sflag [#allocation4], 1
  %1043 = vsyncmov %s1042
  %s1044 = vpop.sfrf %1043
  %p1045 = scmp.eq.s32.totalorder %s1044, 0
  %p1046 = pneg %p1045
  %1048 = shalt.err (%p1046)

</llo_original>
